<compile_context>
chip_gen: v7x
topology: tpu7x:2x2x1
jax: 0.10.0
libtpu: 0.0.40
codegen_flags: <defaults>
</compile_context>

<pallas_src>
import functools

import jax
import jax.numpy as jnp
from jax.experimental import pallas as pl
from jax.experimental.pallas import tpu as pltpu


def _attention_block_kernel(
    x_ref, ln1w_ref, ln1b_ref,
    wk_ref, wq_ref, wv_ref, wo_ref, bo_ref,
    ln2w_ref, ln2b_ref,
    w1_ref, b1_ref, w2_ref, b2_ref,
    o_ref,
    *, n_heads: int, head_size: int, seq_len: int, batch_block: int,
):
    f32 = jnp.float32
    bf16 = jnp.bfloat16
    T = seq_len
    hs = head_size

    x = x_ref[...]                                   # (batch_block*T, E) f32

    def layernorm(z, w, b):
        mu = jnp.mean(z, axis=-1, keepdims=True)
        var = jnp.mean((z - mu) * (z - mu), axis=-1, keepdims=True)   # biased, like torch
        return (z - mu) * jax.lax.rsqrt(var + 1e-5) * w + b

    # ---- LayerNorm 1 (f32) ----
    z = layernorm(x, ln1w_ref[...], ln1b_ref[...])
    zb = z.astype(bf16)

    # ---- QKV projections: one MXU matmul each over all rows (bf16 in, f32 acc) ----
    k_all = jnp.dot(zb, wk_ref[...], preferred_element_type=f32)   # (rows, E)
    q_all = jnp.dot(zb, wq_ref[...], preferred_element_type=f32)   # Wq pre-scaled by hs^-0.5
    v_all = jnp.dot(zb, wv_ref[...], preferred_element_type=f32)

    # ---- head-batched attention: one dot_general per stage over G = batch*heads groups ----
    def to_heads(m):                                 # (rows, E) -> (G, T, hs)
        parts = []
        for b in range(batch_block):
            r0 = b * T
            for h in range(n_heads):
                c0 = h * hs
                parts.append(m[r0:r0 + T, c0:c0 + hs][None, :, :])
        return jnp.concatenate(parts, axis=0)

    kg = to_heads(k_all).astype(bf16)
    qg = to_heads(q_all).astype(bf16)
    vg = to_heads(v_all).astype(bf16)

    rows_i = jax.lax.broadcasted_iota(jnp.int32, (T, T), 0)
    cols_j = jax.lax.broadcasted_iota(jnp.int32, (T, T), 1)
    causal = rows_i >= cols_j                        # tril == 1 region

    # NOTE: reference module computes K @ Q^T (not Q @ K^T) — reproduce exactly.
    wei = jnp.einsum("gid,gjd->gij", kg, qg, preferred_element_type=f32)   # (G, T, T)
    wei = jnp.where(causal, wei, -jnp.inf)
    m = jnp.max(wei, axis=-1, keepdims=True)
    e = jnp.exp(wei - m)
    p = e * pl.reciprocal(jnp.sum(e, axis=-1, keepdims=True), approx=True)
    ctx = jnp.einsum("gij,gjd->gid", p.astype(bf16), vg,
                     preferred_element_type=f32)     # (G, T, hs)

    # concat heads back to (rows, E), matching torch.cat(dim=-1) head ordering
    attn = jnp.concatenate(
        [jnp.concatenate([ctx[b * n_heads + h] for h in range(n_heads)], axis=-1)
         for b in range(batch_block)],
        axis=0)

    proj = jnp.dot(attn.astype(bf16), wo_ref[...], preferred_element_type=f32) + bo_ref[...]
    z1 = z + proj

    # ---- LayerNorm 2 + FeedForward ----
    z2 = layernorm(z1, ln2w_ref[...], ln2b_ref[...])
    hdn = jnp.dot(z2.astype(bf16), w1_ref[...], preferred_element_type=f32) + b1_ref[...]
    hdn = jnp.maximum(hdn, 0.0)
    ff = jnp.dot(hdn.astype(bf16), w2_ref[...], preferred_element_type=f32) + b2_ref[...]

    o_ref[...] = (z2 + ff).astype(o_ref.dtype)


def attention_block(x, params, *, n_heads: int, batch_block=None):
    """x: (B, T, E) float32. params: dict of f32 weights pre-transposed to (in, out)."""
    B, T, E = x.shape
    head_size = E // n_heads
    if batch_block is None:
        batch_block = B     # fold whole batch into one grid step (best on v5e/v6e);
                            # pass batch_block=B//2 on v7x to keep both TensorCores busy.
    assert B % batch_block == 0
    num_blocks = B // batch_block
    rows = batch_block * T

    # --- free weight prep outside the kernel: bf16 matmul operands, scale folded into Wq ---
    bf16 = jnp.bfloat16
    scale = head_size ** -0.5
    wk = params["wk"].astype(bf16)
    wq = (params["wq"] * scale).astype(bf16)
    wv = params["wv"].astype(bf16)
    wo = params["wo"].astype(bf16)
    w1 = params["w1"].astype(bf16)
    w2 = params["w2"].astype(bf16)

    kernel = functools.partial(
        _attention_block_kernel,
        n_heads=n_heads, head_size=head_size, seq_len=T, batch_block=batch_block)

    def wspec(shape):                   # resident weight block, constant block index
        return pl.BlockSpec(shape, lambda i: (0,) * len(shape))

    in_specs = [
        pl.BlockSpec((rows, E), lambda i: (i, 0)),    # x, flattened to (B*T, E)
        wspec((1, E)), wspec((1, E)),                 # ln1 weight, bias
        wspec((E, E)), wspec((E, E)), wspec((E, E)),  # Wk, Wq (pre-scaled), Wv
        wspec((E, E)), wspec((1, E)),                 # Wo, bo
        wspec((1, E)), wspec((1, E)),                 # ln2 weight, bias
        wspec((E, 4 * E)), wspec((1, 4 * E)),         # W1, b1
        wspec((4 * E, E)), wspec((1, E)),             # W2, b2
    ]
    out_spec = pl.BlockSpec((rows, E), lambda i: (i, 0))

    out_flat = pl.pallas_call(
        kernel,
        out_shape=jax.ShapeDtypeStruct((B * T, E), x.dtype),
        grid_spec=pl.GridSpec(grid=(num_blocks,), in_specs=in_specs, out_specs=out_spec),
        compiler_params=pltpu.CompilerParams(
            dimension_semantics=("parallel",),
            vmem_limit_bytes=32 * 1024 * 1024),
    )(
        x.reshape(B * T, E),
        params["ln1_w"], params["ln1_b"],
        wk, wq, wv, wo, params["bo"],
        params["ln2_w"], params["ln2_b"],
        w1, params["b1"], w2, params["b2"],
    )
    return out_flat.reshape(B, T, E)


def _reference(x, params, n_heads):
    """Pure-JAX f32 reference mirroring the PyTorch forward, for a sanity check."""
    E = x.shape[-1]
    hs = E // n_heads

    def ln(z, w, b):
        mu = jnp.mean(z, axis=-1, keepdims=True)
        var = jnp.mean((z - mu) ** 2, axis=-1, keepdims=True)
        return (z - mu) / jnp.sqrt(var + 1e-5) * w + b

    z = ln(x, params["ln1_w"][0], params["ln1_b"][0])
    k = z @ params["wk"]; q = z @ params["wq"]; v = z @ params["wv"]
    T = z.shape[1]
    mask = jnp.tril(jnp.ones((T, T), bool))
    outs = []
    for h in range(n_heads):
        sl = slice(h * hs, (h + 1) * hs)
        wei = jnp.einsum("bid,bjd->bij", k[..., sl], q[..., sl]) * hs ** -0.5
        wei = jnp.where(mask, wei, -jnp.inf)
        wei = jax.nn.softmax(wei, axis=-1)
        outs.append(jnp.einsum("bij,bjd->bid", wei, v[..., sl]))
    attn = jnp.concatenate(outs, axis=-1)
    z = z + (attn @ params["wo"] + params["bo"][0])
    z2 = ln(z, params["ln2_w"][0], params["ln2_b"][0])
    h = jax.nn.relu(z2 @ params["w1"] + params["b1"][0])
    return z2 + (h @ params["w2"] + params["b2"][0])


if __name__ == "__main__":
    # Small shapes consistent with the module: batch=2, seq(block_size)=8,
    # embed_size=32, n_heads=4 -> head_size=8.
    B, T, E, N_HEADS = 2, 8, 32, 4

    key = jax.random.PRNGKey(0)
    keys = jax.random.split(key, 8)

    x = jax.random.normal(keys[0], (B, T, E), dtype=jnp.float32)

    def winit(k, shape):
        return (0.02 * jax.random.normal(k, shape)).astype(jnp.float32)

    params = {
        "ln1_w": jnp.ones((1, E), jnp.float32),
        "ln1_b": jnp.zeros((1, E), jnp.float32),
        "wk": winit(keys[1], (E, E)),       # (in, out) = concat of per-head key projs
        "wq": winit(keys[2], (E, E)),
        "wv": winit(keys[3], (E, E)),
        "wo": winit(keys[4], (E, E)),
        "bo": jnp.zeros((1, E), jnp.float32),
        "ln2_w": jnp.ones((1, E), jnp.float32),
        "ln2_b": jnp.zeros((1, E), jnp.float32),
        "w1": winit(keys[5], (E, 4 * E)),
        "b1": jnp.zeros((1, 4 * E), jnp.float32),
        "w2": winit(keys[6], (4 * E, E)),
        "b2": jnp.zeros((1, E), jnp.float32),
    }

    out = attention_block(x, params, n_heads=N_HEADS)
    out = jax.block_until_ready(out)

    ref = _reference(x, params, N_HEADS)
    assert out.shape == (B, T, E)
    # bf16 matmul operands (f32 accumulation) -> loosened tolerance vs the f32 reference.
    assert jnp.allclose(out, ref, atol=2e-2, rtol=2e-2), "mismatch vs JAX reference"

    print("KERNEL_OK")
</pallas_src>

<mosaic_0001>
module attributes {stable_mosaic.version = 11 : i64} {
  func.func @_attention_block_kernel(%arg0: i32, %arg1: memref<16x32xf32, #tpu.memory_space<vmem>>, %arg2: memref<1x32xf32, #tpu.memory_space<vmem>>, %arg3: memref<1x32xf32, #tpu.memory_space<vmem>>, %arg4: memref<32x32xbf16, #tpu.memory_space<vmem>>, %arg5: memref<32x32xbf16, #tpu.memory_space<vmem>>, %arg6: memref<32x32xbf16, #tpu.memory_space<vmem>>, %arg7: memref<32x32xbf16, #tpu.memory_space<vmem>>, %arg8: memref<1x32xf32, #tpu.memory_space<vmem>>, %arg9: memref<1x32xf32, #tpu.memory_space<vmem>>, %arg10: memref<1x32xf32, #tpu.memory_space<vmem>>, %arg11: memref<32x128xbf16, #tpu.memory_space<vmem>>, %arg12: memref<1x128xf32, #tpu.memory_space<vmem>>, %arg13: memref<128x32xbf16, #tpu.memory_space<vmem>>, %arg14: memref<1x32xf32, #tpu.memory_space<vmem>>, %arg15: memref<16x32xf32, #tpu.memory_space<vmem>>) attributes {dimension_semantics = [#tpu.dimension_semantics<parallel>], iteration_bounds = array<i64: 1>, scalar_prefetch = 0 : i64, scratch_operands = 0 : i64, tpu.core_type = #tpu.core_type<tc>, window_params = [{transform_indices = @transform_0, window_bounds = array<i64: 16, 32>}, {pipeline_mode = #tpu.pipeline_mode<synchronous>, transform_indices = @transform_1, window_bounds = array<i64: 1, 32>}, {pipeline_mode = #tpu.pipeline_mode<synchronous>, transform_indices = @transform_2, window_bounds = array<i64: 1, 32>}, {pipeline_mode = #tpu.pipeline_mode<synchronous>, transform_indices = @transform_3, window_bounds = array<i64: 32, 32>}, {pipeline_mode = #tpu.pipeline_mode<synchronous>, transform_indices = @transform_4, window_bounds = array<i64: 32, 32>}, {pipeline_mode = #tpu.pipeline_mode<synchronous>, transform_indices = @transform_5, window_bounds = array<i64: 32, 32>}, {pipeline_mode = #tpu.pipeline_mode<synchronous>, transform_indices = @transform_6, window_bounds = array<i64: 32, 32>}, {pipeline_mode = #tpu.pipeline_mode<synchronous>, transform_indices = @transform_7, window_bounds = array<i64: 1, 32>}, {pipeline_mode = #tpu.pipeline_mode<synchronous>, transform_indices = @transform_8, window_bounds = array<i64: 1, 32>}, {pipeline_mode = #tpu.pipeline_mode<synchronous>, transform_indices = @transform_9, window_bounds = array<i64: 1, 32>}, {pipeline_mode = #tpu.pipeline_mode<synchronous>, transform_indices = @transform_10, window_bounds = array<i64: 32, 128>}, {pipeline_mode = #tpu.pipeline_mode<synchronous>, transform_indices = @transform_11, window_bounds = array<i64: 1, 128>}, {pipeline_mode = #tpu.pipeline_mode<synchronous>, transform_indices = @transform_12, window_bounds = array<i64: 128, 32>}, {pipeline_mode = #tpu.pipeline_mode<synchronous>, transform_indices = @transform_13, window_bounds = array<i64: 1, 32>}, {transform_indices = @transform_14, window_bounds = array<i64: 16, 32>}]} {
    %c0 = arith.constant 0 : index
    %c0_0 = arith.constant 0 : index
    %0 = vector.load %arg1[%c0, %c0_0] : memref<16x32xf32, #tpu.memory_space<vmem>>, vector<16x32xf32>
    %c0_1 = arith.constant 0 : index
    %c0_2 = arith.constant 0 : index
    %1 = vector.load %arg2[%c0_1, %c0_2] : memref<1x32xf32, #tpu.memory_space<vmem>>, vector<1x32xf32>
    %c0_3 = arith.constant 0 : index
    %c0_4 = arith.constant 0 : index
    %2 = vector.load %arg3[%c0_3, %c0_4] : memref<1x32xf32, #tpu.memory_space<vmem>>, vector<1x32xf32>
    %cst = arith.constant dense<0.000000e+00> : vector<16xf32>
    %3 = vector.multi_reduction <add>, %0, %cst [1] : vector<16x32xf32> to vector<16xf32>
    %4 = vector.shape_cast %3 : vector<16xf32> to vector<16x1xf32>
    %cst_5 = arith.constant 3.200000e+01 : f32
    %5 = vector.broadcast %cst_5 : f32 to vector<16x1xf32>
    %6 = arith.divf %4, %5 : vector<16x1xf32>
    %7 = vector.broadcast %6 : vector<16x1xf32> to vector<16x32xf32>
    %8 = arith.subf %0, %7 : vector<16x32xf32>
    %9 = vector.broadcast %6 : vector<16x1xf32> to vector<16x32xf32>
    %10 = arith.subf %0, %9 : vector<16x32xf32>
    %11 = arith.mulf %8, %10 : vector<16x32xf32>
    %cst_6 = arith.constant dense<0.000000e+00> : vector<16xf32>
    %12 = vector.multi_reduction <add>, %11, %cst_6 [1] : vector<16x32xf32> to vector<16xf32>
    %13 = vector.shape_cast %12 : vector<16xf32> to vector<16x1xf32>
    %cst_7 = arith.constant 3.200000e+01 : f32
    %14 = vector.broadcast %cst_7 : f32 to vector<16x1xf32>
    %15 = arith.divf %13, %14 : vector<16x1xf32>
    %16 = vector.broadcast %6 : vector<16x1xf32> to vector<16x32xf32>
    %17 = arith.subf %0, %16 : vector<16x32xf32>
    %cst_8 = arith.constant 9.99999974E-6 : f32
    %18 = vector.broadcast %cst_8 : f32 to vector<16x1xf32>
    %19 = arith.addf %15, %18 : vector<16x1xf32>
    %20 = math.rsqrt %19 : vector<16x1xf32>
    %21 = vector.broadcast %20 : vector<16x1xf32> to vector<16x32xf32>
    %22 = arith.mulf %17, %21 : vector<16x32xf32>
    %23 = vector.broadcast %1 : vector<1x32xf32> to vector<16x32xf32>
    %24 = arith.mulf %22, %23 : vector<16x32xf32>
    %25 = vector.broadcast %2 : vector<1x32xf32> to vector<16x32xf32>
    %26 = arith.addf %24, %25 : vector<16x32xf32>
    %27 = arith.truncf %26 : vector<16x32xf32> to vector<16x32xbf16>
    %c0_9 = arith.constant 0 : index
    %c0_10 = arith.constant 0 : index
    %28 = vector.load %arg4[%c0_9, %c0_10] : memref<32x32xbf16, #tpu.memory_space<vmem>>, vector<32x32xbf16>
    %cst_11 = arith.constant dense<0.000000e+00> : vector<16x32xf32>
    %29 = tpu.matmul %27, %28, %cst_11 {dimension_numbers = #tpu.dot_dimension_numbers<[1], [0], [0], [1], [0, 0, 1, 1], [], []>} : vector<16x32xbf16>, vector<32x32xbf16>, vector<16x32xf32> -> vector<16x32xf32>
    %c0_12 = arith.constant 0 : index
    %c0_13 = arith.constant 0 : index
    %30 = vector.load %arg5[%c0_12, %c0_13] : memref<32x32xbf16, #tpu.memory_space<vmem>>, vector<32x32xbf16>
    %cst_14 = arith.constant dense<0.000000e+00> : vector<16x32xf32>
    %31 = tpu.matmul %27, %30, %cst_14 {dimension_numbers = #tpu.dot_dimension_numbers<[1], [0], [0], [1], [0, 0, 1, 1], [], []>} : vector<16x32xbf16>, vector<32x32xbf16>, vector<16x32xf32> -> vector<16x32xf32>
    %c0_15 = arith.constant 0 : index
    %c0_16 = arith.constant 0 : index
    %32 = vector.load %arg6[%c0_15, %c0_16] : memref<32x32xbf16, #tpu.memory_space<vmem>>, vector<32x32xbf16>
    %cst_17 = arith.constant dense<0.000000e+00> : vector<16x32xf32>
    %33 = tpu.matmul %27, %32, %cst_17 {dimension_numbers = #tpu.dot_dimension_numbers<[1], [0], [0], [1], [0, 0, 1, 1], [], []>} : vector<16x32xbf16>, vector<32x32xbf16>, vector<16x32xf32> -> vector<16x32xf32>
    %34 = vector.extract_strided_slice %29 {offsets = [0, 0], sizes = [8, 8], strides = [1, 1]} : vector<16x32xf32> to vector<8x8xf32>
    %35 = vector.shape_cast %34 : vector<8x8xf32> to vector<1x8x8xf32>
    %36 = vector.extract_strided_slice %29 {offsets = [0, 8], sizes = [8, 8], strides = [1, 1]} : vector<16x32xf32> to vector<8x8xf32>
    %37 = vector.shape_cast %36 : vector<8x8xf32> to vector<1x8x8xf32>
    %38 = vector.extract_strided_slice %29 {offsets = [0, 16], sizes = [8, 8], strides = [1, 1]} : vector<16x32xf32> to vector<8x8xf32>
    %39 = vector.shape_cast %38 : vector<8x8xf32> to vector<1x8x8xf32>
    %40 = vector.extract_strided_slice %29 {offsets = [0, 24], sizes = [8, 8], strides = [1, 1]} : vector<16x32xf32> to vector<8x8xf32>
    %41 = vector.shape_cast %40 : vector<8x8xf32> to vector<1x8x8xf32>
    %42 = vector.extract_strided_slice %29 {offsets = [8, 0], sizes = [8, 8], strides = [1, 1]} : vector<16x32xf32> to vector<8x8xf32>
    %43 = vector.shape_cast %42 : vector<8x8xf32> to vector<1x8x8xf32>
    %44 = vector.extract_strided_slice %29 {offsets = [8, 8], sizes = [8, 8], strides = [1, 1]} : vector<16x32xf32> to vector<8x8xf32>
    %45 = vector.shape_cast %44 : vector<8x8xf32> to vector<1x8x8xf32>
    %46 = vector.extract_strided_slice %29 {offsets = [8, 16], sizes = [8, 8], strides = [1, 1]} : vector<16x32xf32> to vector<8x8xf32>
    %47 = vector.shape_cast %46 : vector<8x8xf32> to vector<1x8x8xf32>
    %48 = vector.extract_strided_slice %29 {offsets = [8, 24], sizes = [8, 8], strides = [1, 1]} : vector<16x32xf32> to vector<8x8xf32>
    %49 = vector.shape_cast %48 : vector<8x8xf32> to vector<1x8x8xf32>
    %50 = tpu.concatenate %35, %37, %39, %41, %43, %45, %47, %49 in 0 : vector<1x8x8xf32>, vector<1x8x8xf32>, vector<1x8x8xf32>, vector<1x8x8xf32>, vector<1x8x8xf32>, vector<1x8x8xf32>, vector<1x8x8xf32>, vector<1x8x8xf32> -> vector<8x8x8xf32>
    %51 = arith.truncf %50 : vector<8x8x8xf32> to vector<8x8x8xbf16>
    %52 = vector.extract_strided_slice %31 {offsets = [0, 0], sizes = [8, 8], strides = [1, 1]} : vector<16x32xf32> to vector<8x8xf32>
    %53 = vector.shape_cast %52 : vector<8x8xf32> to vector<1x8x8xf32>
    %54 = vector.extract_strided_slice %31 {offsets = [0, 8], sizes = [8, 8], strides = [1, 1]} : vector<16x32xf32> to vector<8x8xf32>
    %55 = vector.shape_cast %54 : vector<8x8xf32> to vector<1x8x8xf32>
    %56 = vector.extract_strided_slice %31 {offsets = [0, 16], sizes = [8, 8], strides = [1, 1]} : vector<16x32xf32> to vector<8x8xf32>
    %57 = vector.shape_cast %56 : vector<8x8xf32> to vector<1x8x8xf32>
    %58 = vector.extract_strided_slice %31 {offsets = [0, 24], sizes = [8, 8], strides = [1, 1]} : vector<16x32xf32> to vector<8x8xf32>
    %59 = vector.shape_cast %58 : vector<8x8xf32> to vector<1x8x8xf32>
    %60 = vector.extract_strided_slice %31 {offsets = [8, 0], sizes = [8, 8], strides = [1, 1]} : vector<16x32xf32> to vector<8x8xf32>
    %61 = vector.shape_cast %60 : vector<8x8xf32> to vector<1x8x8xf32>
    %62 = vector.extract_strided_slice %31 {offsets = [8, 8], sizes = [8, 8], strides = [1, 1]} : vector<16x32xf32> to vector<8x8xf32>
    %63 = vector.shape_cast %62 : vector<8x8xf32> to vector<1x8x8xf32>
    %64 = vector.extract_strided_slice %31 {offsets = [8, 16], sizes = [8, 8], strides = [1, 1]} : vector<16x32xf32> to vector<8x8xf32>
    %65 = vector.shape_cast %64 : vector<8x8xf32> to vector<1x8x8xf32>
    %66 = vector.extract_strided_slice %31 {offsets = [8, 24], sizes = [8, 8], strides = [1, 1]} : vector<16x32xf32> to vector<8x8xf32>
    %67 = vector.shape_cast %66 : vector<8x8xf32> to vector<1x8x8xf32>
    %68 = tpu.concatenate %53, %55, %57, %59, %61, %63, %65, %67 in 0 : vector<1x8x8xf32>, vector<1x8x8xf32>, vector<1x8x8xf32>, vector<1x8x8xf32>, vector<1x8x8xf32>, vector<1x8x8xf32>, vector<1x8x8xf32>, vector<1x8x8xf32> -> vector<8x8x8xf32>
    %69 = arith.truncf %68 : vector<8x8x8xf32> to vector<8x8x8xbf16>
    %70 = vector.extract_strided_slice %33 {offsets = [0, 0], sizes = [8, 8], strides = [1, 1]} : vector<16x32xf32> to vector<8x8xf32>
    %71 = vector.shape_cast %70 : vector<8x8xf32> to vector<1x8x8xf32>
    %72 = vector.extract_strided_slice %33 {offsets = [0, 8], sizes = [8, 8], strides = [1, 1]} : vector<16x32xf32> to vector<8x8xf32>
    %73 = vector.shape_cast %72 : vector<8x8xf32> to vector<1x8x8xf32>
    %74 = vector.extract_strided_slice %33 {offsets = [0, 16], sizes = [8, 8], strides = [1, 1]} : vector<16x32xf32> to vector<8x8xf32>
    %75 = vector.shape_cast %74 : vector<8x8xf32> to vector<1x8x8xf32>
    %76 = vector.extract_strided_slice %33 {offsets = [0, 24], sizes = [8, 8], strides = [1, 1]} : vector<16x32xf32> to vector<8x8xf32>
    %77 = vector.shape_cast %76 : vector<8x8xf32> to vector<1x8x8xf32>
    %78 = vector.extract_strided_slice %33 {offsets = [8, 0], sizes = [8, 8], strides = [1, 1]} : vector<16x32xf32> to vector<8x8xf32>
    %79 = vector.shape_cast %78 : vector<8x8xf32> to vector<1x8x8xf32>
    %80 = vector.extract_strided_slice %33 {offsets = [8, 8], sizes = [8, 8], strides = [1, 1]} : vector<16x32xf32> to vector<8x8xf32>
    %81 = vector.shape_cast %80 : vector<8x8xf32> to vector<1x8x8xf32>
    %82 = vector.extract_strided_slice %33 {offsets = [8, 16], sizes = [8, 8], strides = [1, 1]} : vector<16x32xf32> to vector<8x8xf32>
    %83 = vector.shape_cast %82 : vector<8x8xf32> to vector<1x8x8xf32>
    %84 = vector.extract_strided_slice %33 {offsets = [8, 24], sizes = [8, 8], strides = [1, 1]} : vector<16x32xf32> to vector<8x8xf32>
    %85 = vector.shape_cast %84 : vector<8x8xf32> to vector<1x8x8xf32>
    %86 = tpu.concatenate %71, %73, %75, %77, %79, %81, %83, %85 in 0 : vector<1x8x8xf32>, vector<1x8x8xf32>, vector<1x8x8xf32>, vector<1x8x8xf32>, vector<1x8x8xf32>, vector<1x8x8xf32>, vector<1x8x8xf32>, vector<1x8x8xf32> -> vector<8x8x8xf32>
    %87 = arith.truncf %86 : vector<8x8x8xf32> to vector<8x8x8xbf16>
    %88 = tpu.iota {dimensions = array<i32: 0>} : vector<8x8xi32>
    %89 = tpu.iota {dimensions = array<i32: 1>} : vector<8x8xi32>
    %90 = arith.cmpi sge, %88, %89 : vector<8x8xi32>
    "tpu.trace_start"() <{level = 10 : i32, message = "gid,gjd->gij"}> : () -> ()
    %cst_18 = arith.constant dense<0.000000e+00> : vector<8x8x8xf32>
    %91 = tpu.matmul %51, %69, %cst_18 {dimension_numbers = #tpu.dot_dimension_numbers<[2], [2], [1], [1], [0, 0, 0, 1, 1, 1], [0], [0]>} : vector<8x8x8xbf16>, vector<8x8x8xbf16>, vector<8x8x8xf32> -> vector<8x8x8xf32>
    %cst_19 = arith.constant 0xFF800000 : f32
    "tpu.trace_stop"() : () -> ()
    %92 = vector.shape_cast %90 : vector<8x8xi1> to vector<1x8x8xi1>
    %93 = vector.broadcast %92 : vector<1x8x8xi1> to vector<8x8x8xi1>
    %94 = vector.broadcast %cst_19 : f32 to vector<8x8x8xf32>
    %95 = arith.select %93, %91, %94 : vector<8x8x8xi1>, vector<8x8x8xf32>
    %cst_20 = arith.constant dense<0xFF800000> : vector<8x8xf32>
    %96 = vector.multi_reduction <maximumf>, %95, %cst_20 [2] : vector<8x8x8xf32> to vector<8x8xf32>
    %97 = vector.shape_cast %96 : vector<8x8xf32> to vector<8x8x1xf32>
    %98 = vector.broadcast %97 : vector<8x8x1xf32> to vector<8x8x8xf32>
    %99 = arith.subf %95, %98 : vector<8x8x8xf32>
    %100 = math.exp %99 : vector<8x8x8xf32>
    %cst_21 = arith.constant dense<0.000000e+00> : vector<8x8xf32>
    %101 = vector.multi_reduction <add>, %100, %cst_21 [2] : vector<8x8x8xf32> to vector<8x8xf32>
    %102 = vector.shape_cast %101 : vector<8x8xf32> to vector<8x8x1xf32>
    %103 = tpu.reciprocal %102 {approx = true} : vector<8x8x1xf32> -> vector<8x8x1xf32>
    %104 = vector.broadcast %103 : vector<8x8x1xf32> to vector<8x8x8xf32>
    %105 = arith.mulf %100, %104 : vector<8x8x8xf32>
    %106 = arith.truncf %105 : vector<8x8x8xf32> to vector<8x8x8xbf16>
    "tpu.trace_start"() <{level = 10 : i32, message = "gij,gjd->gid"}> : () -> ()
    %cst_22 = arith.constant dense<0.000000e+00> : vector<8x8x8xf32>
    %107 = tpu.matmul %106, %87, %cst_22 {dimension_numbers = #tpu.dot_dimension_numbers<[2], [1], [1], [2], [0, 0, 0, 1, 1, 2], [0], [0]>} : vector<8x8x8xbf16>, vector<8x8x8xbf16>, vector<8x8x8xf32> -> vector<8x8x8xf32>
    "tpu.trace_stop"() : () -> ()
    %108 = vector.extract_strided_slice %107 {offsets = [0, 0, 0], sizes = [1, 8, 8], strides = [1, 1, 1]} : vector<8x8x8xf32> to vector<1x8x8xf32>
    %109 = vector.shape_cast %108 : vector<1x8x8xf32> to vector<8x8xf32>
    %110 = vector.extract_strided_slice %107 {offsets = [1, 0, 0], sizes = [1, 8, 8], strides = [1, 1, 1]} : vector<8x8x8xf32> to vector<1x8x8xf32>
    %111 = vector.shape_cast %110 : vector<1x8x8xf32> to vector<8x8xf32>
    %112 = vector.extract_strided_slice %107 {offsets = [2, 0, 0], sizes = [1, 8, 8], strides = [1, 1, 1]} : vector<8x8x8xf32> to vector<1x8x8xf32>
    %113 = vector.shape_cast %112 : vector<1x8x8xf32> to vector<8x8xf32>
    %114 = vector.extract_strided_slice %107 {offsets = [3, 0, 0], sizes = [1, 8, 8], strides = [1, 1, 1]} : vector<8x8x8xf32> to vector<1x8x8xf32>
    %115 = vector.shape_cast %114 : vector<1x8x8xf32> to vector<8x8xf32>
    %116 = tpu.concatenate %109, %111, %113, %115 in 1 : vector<8x8xf32>, vector<8x8xf32>, vector<8x8xf32>, vector<8x8xf32> -> vector<8x32xf32>
    %117 = vector.extract_strided_slice %107 {offsets = [4, 0, 0], sizes = [1, 8, 8], strides = [1, 1, 1]} : vector<8x8x8xf32> to vector<1x8x8xf32>
    %118 = vector.shape_cast %117 : vector<1x8x8xf32> to vector<8x8xf32>
    %119 = vector.extract_strided_slice %107 {offsets = [5, 0, 0], sizes = [1, 8, 8], strides = [1, 1, 1]} : vector<8x8x8xf32> to vector<1x8x8xf32>
    %120 = vector.shape_cast %119 : vector<1x8x8xf32> to vector<8x8xf32>
    %121 = vector.extract_strided_slice %107 {offsets = [6, 0, 0], sizes = [1, 8, 8], strides = [1, 1, 1]} : vector<8x8x8xf32> to vector<1x8x8xf32>
    %122 = vector.shape_cast %121 : vector<1x8x8xf32> to vector<8x8xf32>
    %123 = vector.extract_strided_slice %107 {offsets = [7, 0, 0], sizes = [1, 8, 8], strides = [1, 1, 1]} : vector<8x8x8xf32> to vector<1x8x8xf32>
    %124 = vector.shape_cast %123 : vector<1x8x8xf32> to vector<8x8xf32>
    %125 = tpu.concatenate %118, %120, %122, %124 in 1 : vector<8x8xf32>, vector<8x8xf32>, vector<8x8xf32>, vector<8x8xf32> -> vector<8x32xf32>
    %126 = tpu.concatenate %116, %125 in 0 : vector<8x32xf32>, vector<8x32xf32> -> vector<16x32xf32>
    %127 = arith.truncf %126 : vector<16x32xf32> to vector<16x32xbf16>
    %c0_23 = arith.constant 0 : index
    %c0_24 = arith.constant 0 : index
    %128 = vector.load %arg7[%c0_23, %c0_24] : memref<32x32xbf16, #tpu.memory_space<vmem>>, vector<32x32xbf16>
    %cst_25 = arith.constant dense<0.000000e+00> : vector<16x32xf32>
    %129 = tpu.matmul %127, %128, %cst_25 {dimension_numbers = #tpu.dot_dimension_numbers<[1], [0], [0], [1], [0, 0, 1, 1], [], []>} : vector<16x32xbf16>, vector<32x32xbf16>, vector<16x32xf32> -> vector<16x32xf32>
    %c0_26 = arith.constant 0 : index
    %c0_27 = arith.constant 0 : index
    %130 = vector.load %arg8[%c0_26, %c0_27] : memref<1x32xf32, #tpu.memory_space<vmem>>, vector<1x32xf32>
    %131 = vector.broadcast %130 : vector<1x32xf32> to vector<16x32xf32>
    %132 = arith.addf %129, %131 : vector<16x32xf32>
    %133 = arith.addf %26, %132 : vector<16x32xf32>
    %c0_28 = arith.constant 0 : index
    %c0_29 = arith.constant 0 : index
    %134 = vector.load %arg9[%c0_28, %c0_29] : memref<1x32xf32, #tpu.memory_space<vmem>>, vector<1x32xf32>
    %c0_30 = arith.constant 0 : index
    %c0_31 = arith.constant 0 : index
    %135 = vector.load %arg10[%c0_30, %c0_31] : memref<1x32xf32, #tpu.memory_space<vmem>>, vector<1x32xf32>
    %cst_32 = arith.constant dense<0.000000e+00> : vector<16xf32>
    %136 = vector.multi_reduction <add>, %133, %cst_32 [1] : vector<16x32xf32> to vector<16xf32>
    %137 = vector.shape_cast %136 : vector<16xf32> to vector<16x1xf32>
    %cst_33 = arith.constant 3.200000e+01 : f32
    %138 = vector.broadcast %cst_33 : f32 to vector<16x1xf32>
    %139 = arith.divf %137, %138 : vector<16x1xf32>
    %140 = vector.broadcast %139 : vector<16x1xf32> to vector<16x32xf32>
    %141 = arith.subf %133, %140 : vector<16x32xf32>
    %142 = vector.broadcast %139 : vector<16x1xf32> to vector<16x32xf32>
    %143 = arith.subf %133, %142 : vector<16x32xf32>
    %144 = arith.mulf %141, %143 : vector<16x32xf32>
    %cst_34 = arith.constant dense<0.000000e+00> : vector<16xf32>
    %145 = vector.multi_reduction <add>, %144, %cst_34 [1] : vector<16x32xf32> to vector<16xf32>
    %146 = vector.shape_cast %145 : vector<16xf32> to vector<16x1xf32>
    %cst_35 = arith.constant 3.200000e+01 : f32
    %147 = vector.broadcast %cst_35 : f32 to vector<16x1xf32>
    %148 = arith.divf %146, %147 : vector<16x1xf32>
    %149 = vector.broadcast %139 : vector<16x1xf32> to vector<16x32xf32>
    %150 = arith.subf %133, %149 : vector<16x32xf32>
    %cst_36 = arith.constant 9.99999974E-6 : f32
    %151 = vector.broadcast %cst_36 : f32 to vector<16x1xf32>
    %152 = arith.addf %148, %151 : vector<16x1xf32>
    %153 = math.rsqrt %152 : vector<16x1xf32>
    %154 = vector.broadcast %153 : vector<16x1xf32> to vector<16x32xf32>
    %155 = arith.mulf %150, %154 : vector<16x32xf32>
    %156 = vector.broadcast %134 : vector<1x32xf32> to vector<16x32xf32>
    %157 = arith.mulf %155, %156 : vector<16x32xf32>
    %158 = vector.broadcast %135 : vector<1x32xf32> to vector<16x32xf32>
    %159 = arith.addf %157, %158 : vector<16x32xf32>
    %160 = arith.truncf %159 : vector<16x32xf32> to vector<16x32xbf16>
    %c0_37 = arith.constant 0 : index
    %c0_38 = arith.constant 0 : index
    %161 = vector.load %arg11[%c0_37, %c0_38] : memref<32x128xbf16, #tpu.memory_space<vmem>>, vector<32x128xbf16>
    %cst_39 = arith.constant dense<0.000000e+00> : vector<16x128xf32>
    %162 = tpu.matmul %160, %161, %cst_39 {dimension_numbers = #tpu.dot_dimension_numbers<[1], [0], [0], [1], [0, 0, 1, 1], [], []>} : vector<16x32xbf16>, vector<32x128xbf16>, vector<16x128xf32> -> vector<16x128xf32>
    %c0_40 = arith.constant 0 : index
    %c0_41 = arith.constant 0 : index
    %163 = vector.load %arg12[%c0_40, %c0_41] : memref<1x128xf32, #tpu.memory_space<vmem>>, vector<1x128xf32>
    %164 = vector.broadcast %163 : vector<1x128xf32> to vector<16x128xf32>
    %165 = arith.addf %162, %164 : vector<16x128xf32>
    %cst_42 = arith.constant 0.000000e+00 : f32
    %166 = vector.broadcast %cst_42 : f32 to vector<16x128xf32>
    %167 = arith.maximumf %165, %166 : vector<16x128xf32>
    %168 = arith.truncf %167 : vector<16x128xf32> to vector<16x128xbf16>
    %c0_43 = arith.constant 0 : index
    %c0_44 = arith.constant 0 : index
    %169 = vector.load %arg13[%c0_43, %c0_44] : memref<128x32xbf16, #tpu.memory_space<vmem>>, vector<128x32xbf16>
    %cst_45 = arith.constant dense<0.000000e+00> : vector<16x32xf32>
    %170 = tpu.matmul %168, %169, %cst_45 {dimension_numbers = #tpu.dot_dimension_numbers<[1], [0], [0], [1], [0, 0, 1, 1], [], []>} : vector<16x128xbf16>, vector<128x32xbf16>, vector<16x32xf32> -> vector<16x32xf32>
    %c0_46 = arith.constant 0 : index
    %c0_47 = arith.constant 0 : index
    %171 = vector.load %arg14[%c0_46, %c0_47] : memref<1x32xf32, #tpu.memory_space<vmem>>, vector<1x32xf32>
    %172 = vector.broadcast %171 : vector<1x32xf32> to vector<16x32xf32>
    %173 = arith.addf %170, %172 : vector<16x32xf32>
    %174 = arith.addf %159, %173 : vector<16x32xf32>
    %c0_48 = arith.constant 0 : index
    %c0_49 = arith.constant 0 : index
    %175 = vector.load %arg15[%c0_48, %c0_49] : memref<16x32xf32, #tpu.memory_space<vmem>>, vector<16x32xf32>
    tpu.vector_store %arg15[%c0_48, %c0_49], %174 {strides = array<i32>} : memref<16x32xf32, #tpu.memory_space<vmem>>, vector<16x32xf32>,
    return
  }
  func.func @transform_0(%arg0: i32) -> (i32, i32) {
    %c0_i32 = arith.constant 0 : i32
    %c0_i32_0 = arith.constant 0 : i32
    return %arg0, %c0_i32 : i32, i32
  }
  func.func @transform_1(%arg0: i32) -> (i32, i32) {
    %c0_i32 = arith.constant 0 : i32
    %c0_i32_0 = arith.constant 0 : i32
    %c0_i32_1 = arith.constant 0 : i32
    return %c0_i32, %c0_i32_0 : i32, i32
  }
  func.func @transform_2(%arg0: i32) -> (i32, i32) {
    %c0_i32 = arith.constant 0 : i32
    %c0_i32_0 = arith.constant 0 : i32
    %c0_i32_1 = arith.constant 0 : i32
    return %c0_i32, %c0_i32_0 : i32, i32
  }
  func.func @transform_3(%arg0: i32) -> (i32, i32) {
    %c0_i32 = arith.constant 0 : i32
    %c0_i32_0 = arith.constant 0 : i32
    %c0_i32_1 = arith.constant 0 : i32
    return %c0_i32, %c0_i32_0 : i32, i32
  }
  func.func @transform_4(%arg0: i32) -> (i32, i32) {
    %c0_i32 = arith.constant 0 : i32
    %c0_i32_0 = arith.constant 0 : i32
    %c0_i32_1 = arith.constant 0 : i32
    return %c0_i32, %c0_i32_0 : i32, i32
  }
  func.func @transform_5(%arg0: i32) -> (i32, i32) {
    %c0_i32 = arith.constant 0 : i32
    %c0_i32_0 = arith.constant 0 : i32
    %c0_i32_1 = arith.constant 0 : i32
    return %c0_i32, %c0_i32_0 : i32, i32
  }
  func.func @transform_6(%arg0: i32) -> (i32, i32) {
    %c0_i32 = arith.constant 0 : i32
    %c0_i32_0 = arith.constant 0 : i32
    %c0_i32_1 = arith.constant 0 : i32
    return %c0_i32, %c0_i32_0 : i32, i32
  }
  func.func @transform_7(%arg0: i32) -> (i32, i32) {
    %c0_i32 = arith.constant 0 : i32
    %c0_i32_0 = arith.constant 0 : i32
    %c0_i32_1 = arith.constant 0 : i32
    return %c0_i32, %c0_i32_0 : i32, i32
  }
  func.func @transform_8(%arg0: i32) -> (i32, i32) {
    %c0_i32 = arith.constant 0 : i32
    %c0_i32_0 = arith.constant 0 : i32
    %c0_i32_1 = arith.constant 0 : i32
    return %c0_i32, %c0_i32_0 : i32, i32
  }
  func.func @transform_9(%arg0: i32) -> (i32, i32) {
    %c0_i32 = arith.constant 0 : i32
    %c0_i32_0 = arith.constant 0 : i32
    %c0_i32_1 = arith.constant 0 : i32
    return %c0_i32, %c0_i32_0 : i32, i32
  }
  func.func @transform_10(%arg0: i32) -> (i32, i32) {
    %c0_i32 = arith.constant 0 : i32
    %c0_i32_0 = arith.constant 0 : i32
    %c0_i32_1 = arith.constant 0 : i32
    return %c0_i32, %c0_i32_0 : i32, i32
  }
  func.func @transform_11(%arg0: i32) -> (i32, i32) {
    %c0_i32 = arith.constant 0 : i32
    %c0_i32_0 = arith.constant 0 : i32
    %c0_i32_1 = arith.constant 0 : i32
    return %c0_i32, %c0_i32_0 : i32, i32
  }
  func.func @transform_12(%arg0: i32) -> (i32, i32) {
    %c0_i32 = arith.constant 0 : i32
    %c0_i32_0 = arith.constant 0 : i32
    %c0_i32_1 = arith.constant 0 : i32
    return %c0_i32, %c0_i32_0 : i32, i32
  }
  func.func @transform_13(%arg0: i32) -> (i32, i32) {
    %c0_i32 = arith.constant 0 : i32
    %c0_i32_0 = arith.constant 0 : i32
    %c0_i32_1 = arith.constant 0 : i32
    return %c0_i32, %c0_i32_0 : i32, i32
  }
  func.func @transform_14(%arg0: i32) -> (i32, i32) {
    %c0_i32 = arith.constant 0 : i32
    %c0_i32_0 = arith.constant 0 : i32
    return %arg0, %c0_i32 : i32, i32
  }
}

</mosaic_0001>

<llo_original>
// kernel: tpu_custom_call.1
$region0: #{tpu_custom_call.1}
  #allocation0 [shape = 'u32[]', space=smem, size = 0x4, offset = 0x4, fixed_abs, tag = 'smem constant byte address 0x4 - core index']
  #allocation1 [shape = 'u32[144,128]{1,0:T(1,128)}', space=vmem, size = 0x12000, scoped, tag = 'internal scratch']
  %s0 = inlined_call_operand.vmem [shape: f32[16,32], index: 0, kind: input, shape index: {}]
  %s1 = inlined_call_operand.vmem [shape: f32[1,32], index: 1, kind: input, shape index: {}]
  %s2 = inlined_call_operand.vmem [shape: f32[1,32], index: 2, kind: input, shape index: {}]
  %s3 = inlined_call_operand.vmem [shape: bf16[32,32], index: 3, kind: input, shape index: {}]
  %s4 = inlined_call_operand.vmem [shape: bf16[32,32], index: 4, kind: input, shape index: {}]
  %s5 = inlined_call_operand.vmem [shape: bf16[32,32], index: 5, kind: input, shape index: {}]
  %s6 = inlined_call_operand.vmem [shape: bf16[32,32], index: 6, kind: input, shape index: {}]
  %s7 = inlined_call_operand.hbm [shape: f32[1,32], index: 7, kind: input, shape index: {}]
  %s8 = inlined_call_operand.hbm [shape: f32[1,32], index: 8, kind: input, shape index: {}]
  %s9 = inlined_call_operand.hbm [shape: f32[1,32], index: 9, kind: input, shape index: {}]
  %s10 = inlined_call_operand.vmem [shape: bf16[32,128], index: 10, kind: input, shape index: {}]
  %s11 = inlined_call_operand.vmem [shape: f32[1,128], index: 11, kind: input, shape index: {}]
  %s12 = inlined_call_operand.vmem [shape: bf16[128,32], index: 12, kind: input, shape index: {}]
  %s13 = inlined_call_operand.vmem [shape: f32[1,32], index: 13, kind: input, shape index: {}]
  %s14 = inlined_call_operand.hbm [shape: f32[16,32], index: 14, kind: output, shape index: {}]
  %s15 = sld [smem:[#allocation0]]
  $region78: #{tpu_custom_call.1} parent=0
    _
  %s17 = ssub.s32 1, %s15
  %s18 = scalar_select 0, %s17, %s15
  $region1: #{tpu_custom_call.1} parent=0
    #allocation2 [shape = 'u8[512]{0}', space=vmem, size = 0x400, scoped, tag = 'input window, operand 7, single buffered']
    #allocation3 [shape = 's32[1]{0}', space=sflag, size = 0x4, scoped, tag = 'scoped memory for tpu_custom_call.1']
    #allocation4 [shape = 's32[1]{0}', space=sflag, size = 0x4, scoped, tag = 'scoped memory for tpu_custom_call.1']
    #allocation5 [shape = 'u8[512]{0}', space=vmem, size = 0x400, scoped, tag = 'input window, operand 8, single buffered']
    #allocation6 [shape = 's32[1]{0}', space=sflag, size = 0x4, scoped, tag = 'scoped memory for tpu_custom_call.1']
    #allocation7 [shape = 'u8[512]{0}', space=vmem, size = 0x400, scoped, tag = 'input window, operand 9, single buffered']
    #allocation8 [shape = 'u8[8192]{0}', space=vmem, size = 0x2000, scoped, tag = 'output window, operand 0, single buffered']
    %19 = vsyncpa [#allocation3], 0
    %20 = vsyncpa [#allocation6], 0
    %21 = vsyncpa [#allocation4], 0
    // Predicated region
    $region2: #{tpu_custom_call.1} parent=1 // pred_check
      _
    $region3: #{tpu_custom_call.1} parent=1 // pred_check_branch
      %23 = sbr.rel (0) target = $region5
    $region4: #{tpu_custom_call.1} parent=1 // pred_region
      _
    $region5: #{tpu_custom_call.1} parent=1 // pred_fallthru
      _
    // Predicated region
    $region6: #{tpu_custom_call.1} parent=1 // pred_check
      _
    $region7: #{tpu_custom_call.1} parent=1 // pred_check_branch
      %25 = sbr.rel (0) target = $region9
    $region8: #{tpu_custom_call.1} parent=1 // pred_region
      _
    $region9: #{tpu_custom_call.1} parent=1 // pred_fallthru
      _
    // Predicated region
    $region10: #{tpu_custom_call.1} parent=1 // pred_check
      _
    $region11: #{tpu_custom_call.1} parent=1 // pred_check_branch
      %27 = sbr.rel (0) target = $region13
    $region12: #{tpu_custom_call.1} parent=1 // pred_region
      _
    $region13: #{tpu_custom_call.1} parent=1 // pred_fallthru
      _
    // Predicated region
    $region14: #{tpu_custom_call.1} parent=1 // pred_check
      _
    $region15: #{tpu_custom_call.1} parent=1 // pred_check_branch
      %29 = sbr.rel (0) target = $region17
    $region16: #{tpu_custom_call.1} parent=1 // pred_region
      _
    $region17: #{tpu_custom_call.1} parent=1 // pred_fallthru
      _
    // Predicated region
    $region18: #{tpu_custom_call.1} parent=1 // pred_check
      _
    $region19: #{tpu_custom_call.1} parent=1 // pred_check_branch
      %31 = sbr.rel (0) target = $region21
    $region20: #{tpu_custom_call.1} parent=1 // pred_region
      _
    $region21: #{tpu_custom_call.1} parent=1 // pred_fallthru
      _
    // Predicated region
    $region22: #{tpu_custom_call.1} parent=1 // pred_check
      _
    $region23: #{tpu_custom_call.1} parent=1 // pred_check_branch
      %33 = sbr.rel (0) target = $region25
    $region24: #{tpu_custom_call.1} parent=1 // pred_region
      _
    $region25: #{tpu_custom_call.1} parent=1 // pred_fallthru
      _
    // Predicated region
    $region26: #{tpu_custom_call.1} parent=1 // pred_check
      _
    $region27: #{tpu_custom_call.1} parent=1 // pred_check_branch
      %35 = sbr.rel (0) target = $region29
    $region28: #{tpu_custom_call.1} parent=1 // pred_region
      _
    $region29: #{tpu_custom_call.1} parent=1 // pred_fallthru
      _
    // Predicated region
    $region30: #{tpu_custom_call.1} parent=1 // pred_check
      _
    $region31: #{tpu_custom_call.1} parent=1 // pred_check_branch
      %37 = sbr.rel (0) target = $region33
    $region32: #{tpu_custom_call.1} parent=1 // pred_region
      %s39 = ssub.s32 16, 16
      %40 = vsyncadd [#allocation3], %s39
      %s42 = sshll.u32 [#allocation2], 4
      %s43 = int_to_ptr.vmem [resolvable:$true] %s42
      %45 = dma.hbm_to_vmem [thread:$0]  %s7, 16, %s43, [#allocation3]
    $region33: #{tpu_custom_call.1} parent=1 // pred_fallthru
      _
    // Predicated region
    $region34: #{tpu_custom_call.1} parent=1 // pred_check
      _
    $region35: #{tpu_custom_call.1} parent=1 // pred_check_branch
      %47 = sbr.rel (0) target = $region37
    $region36: #{tpu_custom_call.1} parent=1 // pred_region
      %s49 = ssub.s32 16, 16
      %50 = vsyncadd [#allocation6], %s49
      %s52 = sshll.u32 [#allocation5], 4
      %s53 = int_to_ptr.vmem [resolvable:$true] %s52
      %55 = dma.hbm_to_vmem [thread:$0]  %s8, 16, %s53, [#allocation6]
    $region37: #{tpu_custom_call.1} parent=1 // pred_fallthru
      _
    // Predicated region
    $region38: #{tpu_custom_call.1} parent=1 // pred_check
      _
    $region39: #{tpu_custom_call.1} parent=1 // pred_check_branch
      %57 = sbr.rel (0) target = $region41
    $region40: #{tpu_custom_call.1} parent=1 // pred_region
      %s59 = ssub.s32 16, 16
      %60 = vsyncadd [#allocation6], %s59
      %s62 = sshll.u32 [#allocation7], 4
      %s63 = int_to_ptr.vmem [resolvable:$true] %s62
      %65 = dma.hbm_to_vmem [thread:$0]  %s9, 16, %s63, [#allocation6]
    $region41: #{tpu_custom_call.1} parent=1 // pred_fallthru
      _
    // Predicated region
    $region42: #{tpu_custom_call.1} parent=1 // pred_check
      _
    $region43: #{tpu_custom_call.1} parent=1 // pred_check_branch
      %67 = sbr.rel (0) target = $region45
    $region44: #{tpu_custom_call.1} parent=1 // pred_region
      _
    $region45: #{tpu_custom_call.1} parent=1 // pred_fallthru
      _
    // Predicated region
    $region46: #{tpu_custom_call.1} parent=1 // pred_check
      _
    $region47: #{tpu_custom_call.1} parent=1 // pred_check_branch
      %69 = sbr.rel (0) target = $region49
    $region48: #{tpu_custom_call.1} parent=1 // pred_region
      _
    $region49: #{tpu_custom_call.1} parent=1 // pred_fallthru
      _
    // Predicated region
    $region50: #{tpu_custom_call.1} parent=1 // pred_check
      _
    $region51: #{tpu_custom_call.1} parent=1 // pred_check_branch
      %71 = sbr.rel (0) target = $region53
    $region52: #{tpu_custom_call.1} parent=1 // pred_region
      _
    $region53: #{tpu_custom_call.1} parent=1 // pred_fallthru
      _
    // Predicated region
    $region54: #{tpu_custom_call.1} parent=1 // pred_check
      _
    $region55: #{tpu_custom_call.1} parent=1 // pred_check_branch
      %73 = sbr.rel (0) target = $region57
    $region56: #{tpu_custom_call.1} parent=1 // pred_region
      _
    $region57: #{tpu_custom_call.1} parent=1 // pred_fallthru
      _
    // Predicated region
    $region58: #{tpu_custom_call.1} parent=1 // pred_check
      _
    $region59: #{tpu_custom_call.1} parent=1 // pred_check_branch
      %75 = sbr.rel (0) target = $region61
    $region60: #{tpu_custom_call.1} parent=1 // pred_region
      %76 = dma.done [#allocation3], 16
    $region61: #{tpu_custom_call.1} parent=1 // pred_fallthru
      _
    // Predicated region
    $region62: #{tpu_custom_call.1} parent=1 // pred_check
      _
    $region63: #{tpu_custom_call.1} parent=1 // pred_check_branch
      %78 = sbr.rel (0) target = $region65
    $region64: #{tpu_custom_call.1} parent=1 // pred_region
      %79 = dma.done [#allocation6], 16
    $region65: #{tpu_custom_call.1} parent=1 // pred_fallthru
      _
    // Predicated region
    $region66: #{tpu_custom_call.1} parent=1 // pred_check
      _
    $region67: #{tpu_custom_call.1} parent=1 // pred_check_branch
      %81 = sbr.rel (0) target = $region69
    $region68: #{tpu_custom_call.1} parent=1 // pred_region
      %82 = dma.done [#allocation6], 16
    $region69: #{tpu_custom_call.1} parent=1 // pred_fallthru
      _
    %v84 = vld [vmem:[%s0] sm:$0xff]
    %v85 = vld [vmem:[%s0 + $0x8] sm:$0xff]
    %v86 = vld [vmem:[%s1] sm:$0x1]
    %v87 = vld [vmem:[%s2] sm:$0x1]
    %vm88 = vcmask 261120
    %v89 = vsel %vm88, %v84, 0.0
    %90 = vadd.xlane.f32.xlu0 %v89
    %v91 = vpop.xlane.xlu0 %90
    %v92 = vsel %vm88, %v85, 0.0
    %93 = vadd.xlane.f32.xlu0 %v92
    %v94 = vpop.xlane.xlu0 %93
    %v95 = vrcp.pop 32.0
    %v96 = vmul.f32 %v91, %v95
    %v97 = vmul.f32 %v94, %v95
    %v98 = vsub.f32 %v84, %v96
    %v99 = vsub.f32 %v85, %v97
    %v100 = vmul.f32 %v98, %v98
    %v101 = vmul.f32 %v99, %v99
    %v102 = vsel %vm88, %v100, 0.0
    %103 = vadd.xlane.f32.xlu0 %v102
    %v104 = vpop.xlane.xlu0 %103
    %v105 = vsel %vm88, %v101, 0.0
    %106 = vadd.xlane.f32.xlu0 %v105
    %v107 = vpop.xlane.xlu0 %106
    %v108 = vmul.f32 %v104, %v95
    %v109 = vmul.f32 %v107, %v95
    %v110 = vadd.f32 %v108, 1e-05
    %v111 = vadd.f32 %v109, 1e-05
    %v112 = vrsqrt.pop %v110
    %v113 = vrsqrt.pop %v111
    %v114 = vmul.f32 %v98, %v112
    %v115 = vmul.f32 %v99, %v113
    %v117 = vlaneseq
    %v118 = vshrl.u32 %v117, 7
    %v119 = vsub.s32 0, %v118
    %v120 = vrot.slane %v86, %v119
    %v122 = vmul.f32 %v114, %v120
    %v123 = vmul.f32 %v115, %v120
    %v125 = vlaneseq
    %v126 = vshrl.u32 %v125, 7
    %v127 = vsub.s32 0, %v126
    %v128 = vrot.slane %v87, %v127
    %v130 = vadd.f32 %v122, %v128
    %v131 = vadd.f32 %v123, %v128
    %v132 = vpack.c.bf16 %v131, %v130
    %v133 = vld [vmem:[%s3] sm:$0xf]
    %v134 = vld [vmem:[%s3 + $0x4] sm:$0xf]
    %v135 = vld [vmem:[%s3 + $0x8] sm:$0xf]
    %v136 = vld [vmem:[%s3 + $0xc] sm:$0xf]
    %v141 = vunpack.c.l.b16 %v133
    %v142 = vunpack.c.l.b16 %v134
    %v143 = vunpack.c.l.b16 %v135
    %v144 = vunpack.c.l.b16 %v136
    %v145 = vpack.c.b16 %v142, %v141
    %v146 = vpack.c.b16 %v144, %v143
    %v150 = vsel %vm88, %v132, 0
    %152 = vmatprep.subr.bf16.mxu0 0
    %153 = vmatpush1.bf16.msra.mxu0 %v145
    %154 = vmatprep.subr.bf16.mxu0 0
    %155 = vmatpush1.bf16.msra.mxu0 %v146
    %156 = vmatprep.subr.bf16.mxu0 0
    %157 = vmatpush1.bf16.msra.mxu0 0
    %158 = vmatprep.subr.bf16.mxu0 0
    %159 = vmatpush1.bf16.msra.mxu0 0
    %160 = vmatprep.subr.bf16.mxu0 0
    %161 = vmatpush1.bf16.msra.mxu0 0
    %162 = vmatprep.subr.bf16.mxu0 0
    %163 = vmatpush1.bf16.msra.mxu0 0
    %164 = vmatprep.subr.bf16.mxu0 0
    %165 = vmatpush1.bf16.msra.mxu0 0
    %166 = vmatprep.subr.bf16.mxu0 0
    %167 = vmatpush1.bf16.msra.mxu0 0
    %168 = vmatprep.subr.bf16.mxu0 0
    %169 = vmatpush1.bf16.msra.mxu0 0
    %170 = vmatprep.subr.bf16.mxu0 0
    %171 = vmatpush1.bf16.msra.mxu0 0
    %172 = vmatprep.subr.bf16.mxu0 0
    %173 = vmatpush1.bf16.msra.mxu0 0
    %174 = vmatprep.subr.bf16.mxu0 0
    %175 = vmatpush1.bf16.msra.mxu0 0
    %176 = vmatprep.subr.bf16.mxu0 0
    %177 = vmatpush1.bf16.msra.mxu0 0
    %178 = vmatprep.subr.bf16.mxu0 0
    %179 = vmatpush1.bf16.msra.mxu0 0
    %180 = vmatprep.subr.bf16.mxu0 0
    %181 = vmatpush1.bf16.msra.mxu0 0
    %182 = vmatprep.subr.bf16.mxu0 0
    %183 = vmatpush1.bf16.msra.mxu0 0
    %184 = vmatprep.mubr.bf16.mxu0 0
    %185 = vmatmul.mubr.bf16.gmra.mrb[0].mxu0 %v150
    %v186 = vpop.f32.mrb[0].mxu0
    %v187 = vadd.f32 0.0, %v186
    %v188 = vpop.f32.mrb[0].mxu0
    %v189 = vpop.f32.mrb[0].mxu0
    %v190 = vadd.f32 0.0, %v189
    %v191 = vpop.f32.mrb[0].mxu0
    %192 = vdwg.mxu0
    %v193 = vld [vmem:[%s4] sm:$0xf]
    %v194 = vld [vmem:[%s4 + $0x4] sm:$0xf]
    %v195 = vld [vmem:[%s4 + $0x8] sm:$0xf]
    %v196 = vld [vmem:[%s4 + $0xc] sm:$0xf]
    %v201 = vunpack.c.l.b16 %v193
    %v202 = vunpack.c.l.b16 %v194
    %v203 = vunpack.c.l.b16 %v195
    %v204 = vunpack.c.l.b16 %v196
    %v205 = vpack.c.b16 %v202, %v201
    %v206 = vpack.c.b16 %v204, %v203
    %209 = vmatprep.subr.bf16.mxu0 0
    %210 = vmatpush1.bf16.msra.mxu0 %v205
    %211 = vmatprep.subr.bf16.mxu0 0
    %212 = vmatpush1.bf16.msra.mxu0 %v206
    %213 = vmatprep.subr.bf16.mxu0 0
    %214 = vmatpush1.bf16.msra.mxu0 0
    %215 = vmatprep.subr.bf16.mxu0 0
    %216 = vmatpush1.bf16.msra.mxu0 0
    %217 = vmatprep.subr.bf16.mxu0 0
    %218 = vmatpush1.bf16.msra.mxu0 0
    %219 = vmatprep.subr.bf16.mxu0 0
    %220 = vmatpush1.bf16.msra.mxu0 0
    %221 = vmatprep.subr.bf16.mxu0 0
    %222 = vmatpush1.bf16.msra.mxu0 0
    %223 = vmatprep.subr.bf16.mxu0 0
    %224 = vmatpush1.bf16.msra.mxu0 0
    %225 = vmatprep.subr.bf16.mxu0 0
    %226 = vmatpush1.bf16.msra.mxu0 0
    %227 = vmatprep.subr.bf16.mxu0 0
    %228 = vmatpush1.bf16.msra.mxu0 0
    %229 = vmatprep.subr.bf16.mxu0 0
    %230 = vmatpush1.bf16.msra.mxu0 0
    %231 = vmatprep.subr.bf16.mxu0 0
    %232 = vmatpush1.bf16.msra.mxu0 0
    %233 = vmatprep.subr.bf16.mxu0 0
    %234 = vmatpush1.bf16.msra.mxu0 0
    %235 = vmatprep.subr.bf16.mxu0 0
    %236 = vmatpush1.bf16.msra.mxu0 0
    %237 = vmatprep.subr.bf16.mxu0 0
    %238 = vmatpush1.bf16.msra.mxu0 0
    %239 = vmatprep.subr.bf16.mxu0 0
    %240 = vmatpush1.bf16.msra.mxu0 0
    %241 = vmatprep.mubr.bf16.mxu0 0
    %242 = vmatmul.mubr.bf16.gmra.mrb[0].mxu0 %v150
    %v243 = vpop.f32.mrb[0].mxu0
    %v244 = vadd.f32 0.0, %v243
    %v245 = vpop.f32.mrb[0].mxu0
    %v246 = vpop.f32.mrb[0].mxu0
    %v247 = vadd.f32 0.0, %v246
    %v248 = vpop.f32.mrb[0].mxu0
    %249 = vdwg.mxu0
    %v250 = vld [vmem:[%s5] sm:$0xf]
    %v251 = vld [vmem:[%s5 + $0x4] sm:$0xf]
    %v252 = vld [vmem:[%s5 + $0x8] sm:$0xf]
    %v253 = vld [vmem:[%s5 + $0xc] sm:$0xf]
    %v258 = vunpack.c.l.b16 %v250
    %v259 = vunpack.c.l.b16 %v251
    %v260 = vunpack.c.l.b16 %v252
    %v261 = vunpack.c.l.b16 %v253
    %v262 = vpack.c.b16 %v259, %v258
    %v263 = vpack.c.b16 %v261, %v260
    %266 = vmatprep.subr.bf16.mxu0 0
    %267 = vmatpush1.bf16.msra.mxu0 %v262
    %268 = vmatprep.subr.bf16.mxu0 0
    %269 = vmatpush1.bf16.msra.mxu0 %v263
    %270 = vmatprep.subr.bf16.mxu0 0
    %271 = vmatpush1.bf16.msra.mxu0 0
    %272 = vmatprep.subr.bf16.mxu0 0
    %273 = vmatpush1.bf16.msra.mxu0 0
    %274 = vmatprep.subr.bf16.mxu0 0
    %275 = vmatpush1.bf16.msra.mxu0 0
    %276 = vmatprep.subr.bf16.mxu0 0
    %277 = vmatpush1.bf16.msra.mxu0 0
    %278 = vmatprep.subr.bf16.mxu0 0
    %279 = vmatpush1.bf16.msra.mxu0 0
    %280 = vmatprep.subr.bf16.mxu0 0
    %281 = vmatpush1.bf16.msra.mxu0 0
    %282 = vmatprep.subr.bf16.mxu0 0
    %283 = vmatpush1.bf16.msra.mxu0 0
    %284 = vmatprep.subr.bf16.mxu0 0
    %285 = vmatpush1.bf16.msra.mxu0 0
    %286 = vmatprep.subr.bf16.mxu0 0
    %287 = vmatpush1.bf16.msra.mxu0 0
    %288 = vmatprep.subr.bf16.mxu0 0
    %289 = vmatpush1.bf16.msra.mxu0 0
    %290 = vmatprep.subr.bf16.mxu0 0
    %291 = vmatpush1.bf16.msra.mxu0 0
    %292 = vmatprep.subr.bf16.mxu0 0
    %293 = vmatpush1.bf16.msra.mxu0 0
    %294 = vmatprep.subr.bf16.mxu0 0
    %295 = vmatpush1.bf16.msra.mxu0 0
    %296 = vmatprep.subr.bf16.mxu0 0
    %297 = vmatpush1.bf16.msra.mxu0 0
    %298 = vmatprep.mubr.bf16.mxu0 0
    %299 = vmatmul.mubr.bf16.gmra.mrb[0].mxu0 %v150
    %v300 = vpop.f32.mrb[0].mxu0
    %v301 = vadd.f32 0.0, %v300
    %v302 = vpop.f32.mrb[0].mxu0
    %v303 = vpop.f32.mrb[0].mxu0
    %v304 = vadd.f32 0.0, %v303
    %v305 = vpop.f32.mrb[0].mxu0
    %306 = vdwg.mxu0
    %308 = vrot.lane.b32.xlu0 %v187, 120
    %v309 = vpop.permute.xlu0 %308
    %311 = vrot.lane.b32.xlu0 %v187, 112
    %v312 = vpop.permute.xlu0 %311
    %314 = vrot.lane.b32.xlu0 %v187, 104
    %v315 = vpop.permute.xlu0 %314
    %318 = vrot.lane.b32.xlu0 %v190, 120
    %v319 = vpop.permute.xlu0 %318
    %321 = vrot.lane.b32.xlu0 %v190, 112
    %v322 = vpop.permute.xlu0 %321
    %324 = vrot.lane.b32.xlu0 %v190, 104
    %v325 = vpop.permute.xlu0 %324
    %v327 = vpack.c.bf16 %v187, %v187
    %v328 = vpack.c.bf16 %v309, %v309
    %v329 = vpack.c.bf16 %v312, %v312
    %v330 = vpack.c.bf16 %v315, %v315
    %v331 = vpack.c.bf16 %v190, %v190
    %v332 = vpack.c.bf16 %v319, %v319
    %v333 = vpack.c.bf16 %v322, %v322
    %v334 = vpack.c.bf16 %v325, %v325
    %336 = vrot.lane.b32.xlu0 %v244, 120
    %v337 = vpop.permute.xlu0 %336
    %339 = vrot.lane.b32.xlu0 %v244, 112
    %v340 = vpop.permute.xlu0 %339
    %342 = vrot.lane.b32.xlu0 %v244, 104
    %v343 = vpop.permute.xlu0 %342
    %346 = vrot.lane.b32.xlu0 %v247, 120
    %v347 = vpop.permute.xlu0 %346
    %349 = vrot.lane.b32.xlu0 %v247, 112
    %v350 = vpop.permute.xlu0 %349
    %352 = vrot.lane.b32.xlu0 %v247, 104
    %v353 = vpop.permute.xlu0 %352
    %v355 = vpack.c.bf16 %v244, %v244
    %v356 = vpack.c.bf16 %v337, %v337
    %v357 = vpack.c.bf16 %v340, %v340
    %v358 = vpack.c.bf16 %v343, %v343
    %v359 = vpack.c.bf16 %v247, %v247
    %v360 = vpack.c.bf16 %v347, %v347
    %v361 = vpack.c.bf16 %v350, %v350
    %v362 = vpack.c.bf16 %v353, %v353
    %364 = vrot.lane.b32.xlu0 %v301, 120
    %v365 = vpop.permute.xlu0 %364
    %367 = vrot.lane.b32.xlu0 %v301, 112
    %v368 = vpop.permute.xlu0 %367
    %370 = vrot.lane.b32.xlu0 %v301, 104
    %v371 = vpop.permute.xlu0 %370
    %374 = vrot.lane.b32.xlu0 %v304, 120
    %v375 = vpop.permute.xlu0 %374
    %377 = vrot.lane.b32.xlu0 %v304, 112
    %v378 = vpop.permute.xlu0 %377
    %380 = vrot.lane.b32.xlu0 %v304, 104
    %v381 = vpop.permute.xlu0 %380
    %v383 = vpack.c.bf16 %v301, %v301
    %v384 = vpack.c.bf16 %v365, %v365
    %v385 = vpack.c.bf16 %v368, %v368
    %v386 = vpack.c.bf16 %v371, %v371
    %v387 = vpack.c.bf16 %v304, %v304
    %v388 = vpack.c.bf16 %v375, %v375
    %v389 = vpack.c.bf16 %v378, %v378
    %v390 = vpack.c.bf16 %v381, %v381
    %v391 = vlaneseq
    %v392 = vshrl.u32 %v391, 7
    %v393 = vlaneseq
    %v394 = vand.u32 %v393, 127
    %vm395 = vcmp.ge.s32.totalorder %v392, %v394
    %vm396 = vcmask 64512
    %v398 = vsel %vm396, %v327, 0
    %v401 = vsel %vm396, %v355, 0
    %403 = vmatprep.subr.bf16.mxu0 0
    %404 = vmatpush1.bf16.xpose.msra.mxu0 %v401
    %405 = vmatprep.subr.bf16.mxu0 0
    %406 = vmatpush1.bf16.xpose.msra.mxu0 0
    %407 = vmatprep.subr.bf16.mxu0 0
    %408 = vmatpush1.bf16.xpose.msra.mxu0 0
    %409 = vmatprep.subr.bf16.mxu0 0
    %410 = vmatpush1.bf16.xpose.msra.mxu0 0
    %411 = vmatprep.subr.bf16.mxu0 0
    %412 = vmatpush1.bf16.xpose.msra.mxu0 0
    %413 = vmatprep.subr.bf16.mxu0 0
    %414 = vmatpush1.bf16.xpose.msra.mxu0 0
    %415 = vmatprep.subr.bf16.mxu0 0
    %416 = vmatpush1.bf16.xpose.msra.mxu0 0
    %417 = vmatprep.subr.bf16.mxu0 0
    %418 = vmatpush1.bf16.xpose.msra.mxu0 0
    %419 = vmatprep.subr.bf16.mxu0 0
    %420 = vmatpush1.bf16.xpose.msra.mxu0 0
    %421 = vmatprep.subr.bf16.mxu0 0
    %422 = vmatpush1.bf16.xpose.msra.mxu0 0
    %423 = vmatprep.subr.bf16.mxu0 0
    %424 = vmatpush1.bf16.xpose.msra.mxu0 0
    %425 = vmatprep.subr.bf16.mxu0 0
    %426 = vmatpush1.bf16.xpose.msra.mxu0 0
    %427 = vmatprep.subr.bf16.mxu0 0
    %428 = vmatpush1.bf16.xpose.msra.mxu0 0
    %429 = vmatprep.subr.bf16.mxu0 0
    %430 = vmatpush1.bf16.xpose.msra.mxu0 0
    %431 = vmatprep.subr.bf16.mxu0 0
    %432 = vmatpush1.bf16.xpose.msra.mxu0 0
    %433 = vmatprep.subr.bf16.mxu0 0
    %434 = vmatpush1.bf16.xpose.msra.mxu0 0
    %435 = vmatprep.mubr.bf16.mxu0 0
    %436 = vmatmul.mubr.bf16.gmra.mrb[0].mxu0 %v398
    %v437 = vpop.f32.mrb[0].mxu0
    %v438 = vadd.f32 0.0, %v437
    %v439 = vpop.f32.mrb[0].mxu0
    %v440 = vpop.f32.mrb[0].mxu0
    %v441 = vpop.f32.mrb[0].mxu0
    %442 = vdwg.mxu0
    %v444 = vsel %vm396, %v328, 0
    %v447 = vsel %vm396, %v356, 0
    %449 = vmatprep.subr.bf16.mxu0 0
    %450 = vmatpush1.bf16.xpose.msra.mxu0 %v447
    %451 = vmatprep.subr.bf16.mxu0 0
    %452 = vmatpush1.bf16.xpose.msra.mxu0 0
    %453 = vmatprep.subr.bf16.mxu0 0
    %454 = vmatpush1.bf16.xpose.msra.mxu0 0
    %455 = vmatprep.subr.bf16.mxu0 0
    %456 = vmatpush1.bf16.xpose.msra.mxu0 0
    %457 = vmatprep.subr.bf16.mxu0 0
    %458 = vmatpush1.bf16.xpose.msra.mxu0 0
    %459 = vmatprep.subr.bf16.mxu0 0
    %460 = vmatpush1.bf16.xpose.msra.mxu0 0
    %461 = vmatprep.subr.bf16.mxu0 0
    %462 = vmatpush1.bf16.xpose.msra.mxu0 0
    %463 = vmatprep.subr.bf16.mxu0 0
    %464 = vmatpush1.bf16.xpose.msra.mxu0 0
    %465 = vmatprep.subr.bf16.mxu0 0
    %466 = vmatpush1.bf16.xpose.msra.mxu0 0
    %467 = vmatprep.subr.bf16.mxu0 0
    %468 = vmatpush1.bf16.xpose.msra.mxu0 0
    %469 = vmatprep.subr.bf16.mxu0 0
    %470 = vmatpush1.bf16.xpose.msra.mxu0 0
    %471 = vmatprep.subr.bf16.mxu0 0
    %472 = vmatpush1.bf16.xpose.msra.mxu0 0
    %473 = vmatprep.subr.bf16.mxu0 0
    %474 = vmatpush1.bf16.xpose.msra.mxu0 0
    %475 = vmatprep.subr.bf16.mxu0 0
    %476 = vmatpush1.bf16.xpose.msra.mxu0 0
    %477 = vmatprep.subr.bf16.mxu0 0
    %478 = vmatpush1.bf16.xpose.msra.mxu0 0
    %479 = vmatprep.subr.bf16.mxu0 0
    %480 = vmatpush1.bf16.xpose.msra.mxu0 0
    %481 = vmatprep.mubr.bf16.mxu0 0
    %482 = vmatmul.mubr.bf16.gmra.mrb[0].mxu0 %v444
    %v483 = vpop.f32.mrb[0].mxu0
    %v484 = vadd.f32 0.0, %v483
    %v485 = vpop.f32.mrb[0].mxu0
    %v486 = vpop.f32.mrb[0].mxu0
    %v487 = vpop.f32.mrb[0].mxu0
    %488 = vdwg.mxu0
    %v490 = vsel %vm396, %v329, 0
    %v493 = vsel %vm396, %v357, 0
    %495 = vmatprep.subr.bf16.mxu0 0
    %496 = vmatpush1.bf16.xpose.msra.mxu0 %v493
    %497 = vmatprep.subr.bf16.mxu0 0
    %498 = vmatpush1.bf16.xpose.msra.mxu0 0
    %499 = vmatprep.subr.bf16.mxu0 0
    %500 = vmatpush1.bf16.xpose.msra.mxu0 0
    %501 = vmatprep.subr.bf16.mxu0 0
    %502 = vmatpush1.bf16.xpose.msra.mxu0 0
    %503 = vmatprep.subr.bf16.mxu0 0
    %504 = vmatpush1.bf16.xpose.msra.mxu0 0
    %505 = vmatprep.subr.bf16.mxu0 0
    %506 = vmatpush1.bf16.xpose.msra.mxu0 0
    %507 = vmatprep.subr.bf16.mxu0 0
    %508 = vmatpush1.bf16.xpose.msra.mxu0 0
    %509 = vmatprep.subr.bf16.mxu0 0
    %510 = vmatpush1.bf16.xpose.msra.mxu0 0
    %511 = vmatprep.subr.bf16.mxu0 0
    %512 = vmatpush1.bf16.xpose.msra.mxu0 0
    %513 = vmatprep.subr.bf16.mxu0 0
    %514 = vmatpush1.bf16.xpose.msra.mxu0 0
    %515 = vmatprep.subr.bf16.mxu0 0
    %516 = vmatpush1.bf16.xpose.msra.mxu0 0
    %517 = vmatprep.subr.bf16.mxu0 0
    %518 = vmatpush1.bf16.xpose.msra.mxu0 0
    %519 = vmatprep.subr.bf16.mxu0 0
    %520 = vmatpush1.bf16.xpose.msra.mxu0 0
    %521 = vmatprep.subr.bf16.mxu0 0
    %522 = vmatpush1.bf16.xpose.msra.mxu0 0
    %523 = vmatprep.subr.bf16.mxu0 0
    %524 = vmatpush1.bf16.xpose.msra.mxu0 0
    %525 = vmatprep.subr.bf16.mxu0 0
    %526 = vmatpush1.bf16.xpose.msra.mxu0 0
    %527 = vmatprep.mubr.bf16.mxu0 0
    %528 = vmatmul.mubr.bf16.gmra.mrb[0].mxu0 %v490
    %v529 = vpop.f32.mrb[0].mxu0
    %v530 = vadd.f32 0.0, %v529
    %v531 = vpop.f32.mrb[0].mxu0
    %v532 = vpop.f32.mrb[0].mxu0
    %v533 = vpop.f32.mrb[0].mxu0
    %534 = vdwg.mxu0
    %v536 = vsel %vm396, %v330, 0
    %v539 = vsel %vm396, %v358, 0
    %541 = vmatprep.subr.bf16.mxu0 0
    %542 = vmatpush1.bf16.xpose.msra.mxu0 %v539
    %543 = vmatprep.subr.bf16.mxu0 0
    %544 = vmatpush1.bf16.xpose.msra.mxu0 0
    %545 = vmatprep.subr.bf16.mxu0 0
    %546 = vmatpush1.bf16.xpose.msra.mxu0 0
    %547 = vmatprep.subr.bf16.mxu0 0
    %548 = vmatpush1.bf16.xpose.msra.mxu0 0
    %549 = vmatprep.subr.bf16.mxu0 0
    %550 = vmatpush1.bf16.xpose.msra.mxu0 0
    %551 = vmatprep.subr.bf16.mxu0 0
    %552 = vmatpush1.bf16.xpose.msra.mxu0 0
    %553 = vmatprep.subr.bf16.mxu0 0
    %554 = vmatpush1.bf16.xpose.msra.mxu0 0
    %555 = vmatprep.subr.bf16.mxu0 0
    %556 = vmatpush1.bf16.xpose.msra.mxu0 0
    %557 = vmatprep.subr.bf16.mxu0 0
    %558 = vmatpush1.bf16.xpose.msra.mxu0 0
    %559 = vmatprep.subr.bf16.mxu0 0
    %560 = vmatpush1.bf16.xpose.msra.mxu0 0
    %561 = vmatprep.subr.bf16.mxu0 0
    %562 = vmatpush1.bf16.xpose.msra.mxu0 0
    %563 = vmatprep.subr.bf16.mxu0 0
    %564 = vmatpush1.bf16.xpose.msra.mxu0 0
    %565 = vmatprep.subr.bf16.mxu0 0
    %566 = vmatpush1.bf16.xpose.msra.mxu0 0
    %567 = vmatprep.subr.bf16.mxu0 0
    %568 = vmatpush1.bf16.xpose.msra.mxu0 0
    %569 = vmatprep.subr.bf16.mxu0 0
    %570 = vmatpush1.bf16.xpose.msra.mxu0 0
    %571 = vmatprep.subr.bf16.mxu0 0
    %572 = vmatpush1.bf16.xpose.msra.mxu0 0
    %573 = vmatprep.mubr.bf16.mxu0 0
    %574 = vmatmul.mubr.bf16.gmra.mrb[0].mxu0 %v536
    %v575 = vpop.f32.mrb[0].mxu0
    %v576 = vadd.f32 0.0, %v575
    %v577 = vpop.f32.mrb[0].mxu0
    %v578 = vpop.f32.mrb[0].mxu0
    %v579 = vpop.f32.mrb[0].mxu0
    %580 = vdwg.mxu0
    %v582 = vsel %vm396, %v331, 0
    %v585 = vsel %vm396, %v359, 0
    %587 = vmatprep.subr.bf16.mxu0 0
    %588 = vmatpush1.bf16.xpose.msra.mxu0 %v585
    %589 = vmatprep.subr.bf16.mxu0 0
    %590 = vmatpush1.bf16.xpose.msra.mxu0 0
    %591 = vmatprep.subr.bf16.mxu0 0
    %592 = vmatpush1.bf16.xpose.msra.mxu0 0
    %593 = vmatprep.subr.bf16.mxu0 0
    %594 = vmatpush1.bf16.xpose.msra.mxu0 0
    %595 = vmatprep.subr.bf16.mxu0 0
    %596 = vmatpush1.bf16.xpose.msra.mxu0 0
    %597 = vmatprep.subr.bf16.mxu0 0
    %598 = vmatpush1.bf16.xpose.msra.mxu0 0
    %599 = vmatprep.subr.bf16.mxu0 0
    %600 = vmatpush1.bf16.xpose.msra.mxu0 0
    %601 = vmatprep.subr.bf16.mxu0 0
    %602 = vmatpush1.bf16.xpose.msra.mxu0 0
    %603 = vmatprep.subr.bf16.mxu0 0
    %604 = vmatpush1.bf16.xpose.msra.mxu0 0
    %605 = vmatprep.subr.bf16.mxu0 0
    %606 = vmatpush1.bf16.xpose.msra.mxu0 0
    %607 = vmatprep.subr.bf16.mxu0 0
    %608 = vmatpush1.bf16.xpose.msra.mxu0 0
    %609 = vmatprep.subr.bf16.mxu0 0
    %610 = vmatpush1.bf16.xpose.msra.mxu0 0
    %611 = vmatprep.subr.bf16.mxu0 0
    %612 = vmatpush1.bf16.xpose.msra.mxu0 0
    %613 = vmatprep.subr.bf16.mxu0 0
    %614 = vmatpush1.bf16.xpose.msra.mxu0 0
    %615 = vmatprep.subr.bf16.mxu0 0
    %616 = vmatpush1.bf16.xpose.msra.mxu0 0
    %617 = vmatprep.subr.bf16.mxu0 0
    %618 = vmatpush1.bf16.xpose.msra.mxu0 0
    %619 = vmatprep.mubr.bf16.mxu0 0
    %620 = vmatmul.mubr.bf16.gmra.mrb[0].mxu0 %v582
    %v621 = vpop.f32.mrb[0].mxu0
    %v622 = vadd.f32 0.0, %v621
    %v623 = vpop.f32.mrb[0].mxu0
    %v624 = vpop.f32.mrb[0].mxu0
    %v625 = vpop.f32.mrb[0].mxu0
    %626 = vdwg.mxu0
    %v628 = vsel %vm396, %v332, 0
    %v631 = vsel %vm396, %v360, 0
    %633 = vmatprep.subr.bf16.mxu0 0
    %634 = vmatpush1.bf16.xpose.msra.mxu0 %v631
    %635 = vmatprep.subr.bf16.mxu0 0
    %636 = vmatpush1.bf16.xpose.msra.mxu0 0
    %637 = vmatprep.subr.bf16.mxu0 0
    %638 = vmatpush1.bf16.xpose.msra.mxu0 0
    %639 = vmatprep.subr.bf16.mxu0 0
    %640 = vmatpush1.bf16.xpose.msra.mxu0 0
    %641 = vmatprep.subr.bf16.mxu0 0
    %642 = vmatpush1.bf16.xpose.msra.mxu0 0
    %643 = vmatprep.subr.bf16.mxu0 0
    %644 = vmatpush1.bf16.xpose.msra.mxu0 0
    %645 = vmatprep.subr.bf16.mxu0 0
    %646 = vmatpush1.bf16.xpose.msra.mxu0 0
    %647 = vmatprep.subr.bf16.mxu0 0
    %648 = vmatpush1.bf16.xpose.msra.mxu0 0
    %649 = vmatprep.subr.bf16.mxu0 0
    %650 = vmatpush1.bf16.xpose.msra.mxu0 0
    %651 = vmatprep.subr.bf16.mxu0 0
    %652 = vmatpush1.bf16.xpose.msra.mxu0 0
    %653 = vmatprep.subr.bf16.mxu0 0
    %654 = vmatpush1.bf16.xpose.msra.mxu0 0
    %655 = vmatprep.subr.bf16.mxu0 0
    %656 = vmatpush1.bf16.xpose.msra.mxu0 0
    %657 = vmatprep.subr.bf16.mxu0 0
    %658 = vmatpush1.bf16.xpose.msra.mxu0 0
    %659 = vmatprep.subr.bf16.mxu0 0
    %660 = vmatpush1.bf16.xpose.msra.mxu0 0
    %661 = vmatprep.subr.bf16.mxu0 0
    %662 = vmatpush1.bf16.xpose.msra.mxu0 0
    %663 = vmatprep.subr.bf16.mxu0 0
    %664 = vmatpush1.bf16.xpose.msra.mxu0 0
    %665 = vmatprep.mubr.bf16.mxu0 0
    %666 = vmatmul.mubr.bf16.gmra.mrb[0].mxu0 %v628
    %v667 = vpop.f32.mrb[0].mxu0
    %v668 = vadd.f32 0.0, %v667
    %v669 = vpop.f32.mrb[0].mxu0
    %v670 = vpop.f32.mrb[0].mxu0
    %v671 = vpop.f32.mrb[0].mxu0
    %672 = vdwg.mxu0
    %v674 = vsel %vm396, %v333, 0
    %v677 = vsel %vm396, %v361, 0
    %679 = vmatprep.subr.bf16.mxu0 0
    %680 = vmatpush1.bf16.xpose.msra.mxu0 %v677
    %681 = vmatprep.subr.bf16.mxu0 0
    %682 = vmatpush1.bf16.xpose.msra.mxu0 0
    %683 = vmatprep.subr.bf16.mxu0 0
    %684 = vmatpush1.bf16.xpose.msra.mxu0 0
    %685 = vmatprep.subr.bf16.mxu0 0
    %686 = vmatpush1.bf16.xpose.msra.mxu0 0
    %687 = vmatprep.subr.bf16.mxu0 0
    %688 = vmatpush1.bf16.xpose.msra.mxu0 0
    %689 = vmatprep.subr.bf16.mxu0 0
    %690 = vmatpush1.bf16.xpose.msra.mxu0 0
    %691 = vmatprep.subr.bf16.mxu0 0
    %692 = vmatpush1.bf16.xpose.msra.mxu0 0
    %693 = vmatprep.subr.bf16.mxu0 0
    %694 = vmatpush1.bf16.xpose.msra.mxu0 0
    %695 = vmatprep.subr.bf16.mxu0 0
    %696 = vmatpush1.bf16.xpose.msra.mxu0 0
    %697 = vmatprep.subr.bf16.mxu0 0
    %698 = vmatpush1.bf16.xpose.msra.mxu0 0
    %699 = vmatprep.subr.bf16.mxu0 0
    %700 = vmatpush1.bf16.xpose.msra.mxu0 0
    %701 = vmatprep.subr.bf16.mxu0 0
    %702 = vmatpush1.bf16.xpose.msra.mxu0 0
    %703 = vmatprep.subr.bf16.mxu0 0
    %704 = vmatpush1.bf16.xpose.msra.mxu0 0
    %705 = vmatprep.subr.bf16.mxu0 0
    %706 = vmatpush1.bf16.xpose.msra.mxu0 0
    %707 = vmatprep.subr.bf16.mxu0 0
    %708 = vmatpush1.bf16.xpose.msra.mxu0 0
    %709 = vmatprep.subr.bf16.mxu0 0
    %710 = vmatpush1.bf16.xpose.msra.mxu0 0
    %711 = vmatprep.mubr.bf16.mxu0 0
    %712 = vmatmul.mubr.bf16.gmra.mrb[0].mxu0 %v674
    %v713 = vpop.f32.mrb[0].mxu0
    %v714 = vadd.f32 0.0, %v713
    %v715 = vpop.f32.mrb[0].mxu0
    %v716 = vpop.f32.mrb[0].mxu0
    %v717 = vpop.f32.mrb[0].mxu0
    %718 = vdwg.mxu0
    %v720 = vsel %vm396, %v334, 0
    %v723 = vsel %vm396, %v362, 0
    %725 = vmatprep.subr.bf16.mxu0 0
    %726 = vmatpush1.bf16.xpose.msra.mxu0 %v723
    %727 = vmatprep.subr.bf16.mxu0 0
    %728 = vmatpush1.bf16.xpose.msra.mxu0 0
    %729 = vmatprep.subr.bf16.mxu0 0
    %730 = vmatpush1.bf16.xpose.msra.mxu0 0
    %731 = vmatprep.subr.bf16.mxu0 0
    %732 = vmatpush1.bf16.xpose.msra.mxu0 0
    %733 = vmatprep.subr.bf16.mxu0 0
    %734 = vmatpush1.bf16.xpose.msra.mxu0 0
    %735 = vmatprep.subr.bf16.mxu0 0
    %736 = vmatpush1.bf16.xpose.msra.mxu0 0
    %737 = vmatprep.subr.bf16.mxu0 0
    %738 = vmatpush1.bf16.xpose.msra.mxu0 0
    %739 = vmatprep.subr.bf16.mxu0 0
    %740 = vmatpush1.bf16.xpose.msra.mxu0 0
    %741 = vmatprep.subr.bf16.mxu0 0
    %742 = vmatpush1.bf16.xpose.msra.mxu0 0
    %743 = vmatprep.subr.bf16.mxu0 0
    %744 = vmatpush1.bf16.xpose.msra.mxu0 0
    %745 = vmatprep.subr.bf16.mxu0 0
    %746 = vmatpush1.bf16.xpose.msra.mxu0 0
    %747 = vmatprep.subr.bf16.mxu0 0
    %748 = vmatpush1.bf16.xpose.msra.mxu0 0
    %749 = vmatprep.subr.bf16.mxu0 0
    %750 = vmatpush1.bf16.xpose.msra.mxu0 0
    %751 = vmatprep.subr.bf16.mxu0 0
    %752 = vmatpush1.bf16.xpose.msra.mxu0 0
    %753 = vmatprep.subr.bf16.mxu0 0
    %754 = vmatpush1.bf16.xpose.msra.mxu0 0
    %755 = vmatprep.subr.bf16.mxu0 0
    %756 = vmatpush1.bf16.xpose.msra.mxu0 0
    %757 = vmatprep.mubr.bf16.mxu0 0
    %758 = vmatmul.mubr.bf16.gmra.mrb[0].mxu0 %v720
    %v759 = vpop.f32.mrb[0].mxu0
    %v760 = vadd.f32 0.0, %v759
    %v761 = vpop.f32.mrb[0].mxu0
    %v762 = vpop.f32.mrb[0].mxu0
    %v763 = vpop.f32.mrb[0].mxu0
    %764 = vdwg.mxu0
    %v765 = vsel %vm395, 1, 0
    %vm766 = vcmp.eq.s32.totalorder %v765, 1
    %v767 = vsel %vm766, %v438, -inf
    %v768 = vsel %vm766, %v484, -inf
    %v769 = vsel %vm766, %v530, -inf
    %v770 = vsel %vm766, %v576, -inf
    %v771 = vsel %vm766, %v622, -inf
    %v772 = vsel %vm766, %v668, -inf
    %v773 = vsel %vm766, %v714, -inf
    %v774 = vsel %vm766, %v760, -inf
    %v775 = vsel %vm396, %v767, -inf
    %776 = vmax.xlane.f32.xlu0 %v775
    %v777 = vpop.xlane.xlu0 %776
    %v778 = vsel %vm396, %v768, -inf
    %779 = vmax.xlane.f32.xlu0 %v778
    %v780 = vpop.xlane.xlu0 %779
    %v781 = vsel %vm396, %v769, -inf
    %782 = vmax.xlane.f32.xlu0 %v781
    %v783 = vpop.xlane.xlu0 %782
    %v784 = vsel %vm396, %v770, -inf
    %785 = vmax.xlane.f32.xlu0 %v784
    %v786 = vpop.xlane.xlu0 %785
    %v787 = vsel %vm396, %v771, -inf
    %788 = vmax.xlane.f32.xlu0 %v787
    %v789 = vpop.xlane.xlu0 %788
    %v790 = vsel %vm396, %v772, -inf
    %791 = vmax.xlane.f32.xlu0 %v790
    %v792 = vpop.xlane.xlu0 %791
    %v793 = vsel %vm396, %v773, -inf
    %794 = vmax.xlane.f32.xlu0 %v793
    %v795 = vpop.xlane.xlu0 %794
    %v796 = vsel %vm396, %v774, -inf
    %797 = vmax.xlane.f32.xlu0 %v796
    %v798 = vpop.xlane.xlu0 %797
    %v799 = vsub.f32 %v767, %v777
    %v800 = vsub.f32 %v768, %v780
    %v801 = vsub.f32 %v769, %v783
    %v802 = vsub.f32 %v770, %v786
    %v803 = vsub.f32 %v771, %v789
    %v804 = vsub.f32 %v772, %v792
    %v805 = vsub.f32 %v773, %v795
    %v806 = vsub.f32 %v774, %v798
    %v807 = vmul.f32 %v799, 1.442695
    %v808 = vpow.pop %v807
    %v809 = vmul.f32 %v800, 1.442695
    %v810 = vpow.pop %v809
    %v811 = vmul.f32 %v801, 1.442695
    %v812 = vpow.pop %v811
    %v813 = vmul.f32 %v802, 1.442695
    %v814 = vpow.pop %v813
    %v815 = vmul.f32 %v803, 1.442695
    %v816 = vpow.pop %v815
    %v817 = vmul.f32 %v804, 1.442695
    %v818 = vpow.pop %v817
    %v819 = vmul.f32 %v805, 1.442695
    %v820 = vpow.pop %v819
    %v821 = vmul.f32 %v806, 1.442695
    %v822 = vpow.pop %v821
    %v823 = vsel %vm396, %v808, 0.0
    %824 = vadd.xlane.f32.xlu0 %v823
    %v825 = vpop.xlane.xlu0 %824
    %v826 = vsel %vm396, %v810, 0.0
    %827 = vadd.xlane.f32.xlu0 %v826
    %v828 = vpop.xlane.xlu0 %827
    %v829 = vsel %vm396, %v812, 0.0
    %830 = vadd.xlane.f32.xlu0 %v829
    %v831 = vpop.xlane.xlu0 %830
    %v832 = vsel %vm396, %v814, 0.0
    %833 = vadd.xlane.f32.xlu0 %v832
    %v834 = vpop.xlane.xlu0 %833
    %v835 = vsel %vm396, %v816, 0.0
    %836 = vadd.xlane.f32.xlu0 %v835
    %v837 = vpop.xlane.xlu0 %836
    %v838 = vsel %vm396, %v818, 0.0
    %839 = vadd.xlane.f32.xlu0 %v838
    %v840 = vpop.xlane.xlu0 %839
    %v841 = vsel %vm396, %v820, 0.0
    %842 = vadd.xlane.f32.xlu0 %v841
    %v843 = vpop.xlane.xlu0 %842
    %v844 = vsel %vm396, %v822, 0.0
    %845 = vadd.xlane.f32.xlu0 %v844
    %v846 = vpop.xlane.xlu0 %845
    %v847 = vrcp.pop %v825
    %v848 = vrcp.pop %v828
    %v849 = vrcp.pop %v831
    %v850 = vrcp.pop %v834
    %v851 = vrcp.pop %v837
    %v852 = vrcp.pop %v840
    %v853 = vrcp.pop %v843
    %v854 = vrcp.pop %v846
    %v855 = vmul.f32 %v808, %v847
    %v856 = vmul.f32 %v810, %v848
    %v857 = vmul.f32 %v812, %v849
    %v858 = vmul.f32 %v814, %v850
    %v859 = vmul.f32 %v816, %v851
    %v860 = vmul.f32 %v818, %v852
    %v861 = vmul.f32 %v820, %v853
    %v862 = vmul.f32 %v822, %v854
    %v863 = vpack.c.bf16 %v855, %v855
    %v864 = vpack.c.bf16 %v856, %v856
    %v865 = vpack.c.bf16 %v857, %v857
    %v866 = vpack.c.bf16 %v858, %v858
    %v867 = vpack.c.bf16 %v859, %v859
    %v868 = vpack.c.bf16 %v860, %v860
    %v869 = vpack.c.bf16 %v861, %v861
    %v870 = vpack.c.bf16 %v862, %v862
    %v872 = vsel %vm396, %v863, 0
    %vm874 = vcmask 1043456
    %v876 = vsel %vm874, %v383, 0
    %878 = vmatprep.subr.bf16.mxu0 0
    %879 = vmatpush1.bf16.msra.mxu0 %v876
    %880 = vmatprep.subr.bf16.mxu0 0
    %881 = vmatpush1.bf16.msra.mxu0 0
    %882 = vmatprep.subr.bf16.mxu0 0
    %883 = vmatpush1.bf16.msra.mxu0 0
    %884 = vmatprep.subr.bf16.mxu0 0
    %885 = vmatpush1.bf16.msra.mxu0 0
    %886 = vmatprep.subr.bf16.mxu0 0
    %887 = vmatpush1.bf16.msra.mxu0 0
    %888 = vmatprep.subr.bf16.mxu0 0
    %889 = vmatpush1.bf16.msra.mxu0 0
    %890 = vmatprep.subr.bf16.mxu0 0
    %891 = vmatpush1.bf16.msra.mxu0 0
    %892 = vmatprep.subr.bf16.mxu0 0
    %893 = vmatpush1.bf16.msra.mxu0 0
    %894 = vmatprep.subr.bf16.mxu0 0
    %895 = vmatpush1.bf16.msra.mxu0 0
    %896 = vmatprep.subr.bf16.mxu0 0
    %897 = vmatpush1.bf16.msra.mxu0 0
    %898 = vmatprep.subr.bf16.mxu0 0
    %899 = vmatpush1.bf16.msra.mxu0 0
    %900 = vmatprep.subr.bf16.mxu0 0
    %901 = vmatpush1.bf16.msra.mxu0 0
    %902 = vmatprep.subr.bf16.mxu0 0
    %903 = vmatpush1.bf16.msra.mxu0 0
    %904 = vmatprep.subr.bf16.mxu0 0
    %905 = vmatpush1.bf16.msra.mxu0 0
    %906 = vmatprep.subr.bf16.mxu0 0
    %907 = vmatpush1.bf16.msra.mxu0 0
    %908 = vmatprep.subr.bf16.mxu0 0
    %909 = vmatpush1.bf16.msra.mxu0 0
    %910 = vmatprep.mubr.bf16.mxu0 0
    %911 = vmatmul.mubr.bf16.gmra.mrb[0].mxu0 %v872
    %v912 = vpop.f32.mrb[0].mxu0
    %v913 = vadd.f32 0.0, %v912
    %v914 = vpop.f32.mrb[0].mxu0
    %v915 = vpop.f32.mrb[0].mxu0
    %v916 = vpop.f32.mrb[0].mxu0
    %917 = vdwg.mxu0
    %v919 = vsel %vm396, %v864, 0
    %v922 = vsel %vm874, %v384, 0
    %924 = vmatprep.subr.bf16.mxu0 0
    %925 = vmatpush1.bf16.msra.mxu0 %v922
    %926 = vmatprep.subr.bf16.mxu0 0
    %927 = vmatpush1.bf16.msra.mxu0 0
    %928 = vmatprep.subr.bf16.mxu0 0
    %929 = vmatpush1.bf16.msra.mxu0 0
    %930 = vmatprep.subr.bf16.mxu0 0
    %931 = vmatpush1.bf16.msra.mxu0 0
    %932 = vmatprep.subr.bf16.mxu0 0
    %933 = vmatpush1.bf16.msra.mxu0 0
    %934 = vmatprep.subr.bf16.mxu0 0
    %935 = vmatpush1.bf16.msra.mxu0 0
    %936 = vmatprep.subr.bf16.mxu0 0
    %937 = vmatpush1.bf16.msra.mxu0 0
    %938 = vmatprep.subr.bf16.mxu0 0
    %939 = vmatpush1.bf16.msra.mxu0 0
    %940 = vmatprep.subr.bf16.mxu0 0
    %941 = vmatpush1.bf16.msra.mxu0 0
    %942 = vmatprep.subr.bf16.mxu0 0
    %943 = vmatpush1.bf16.msra.mxu0 0
    %944 = vmatprep.subr.bf16.mxu0 0
    %945 = vmatpush1.bf16.msra.mxu0 0
    %946 = vmatprep.subr.bf16.mxu0 0
    %947 = vmatpush1.bf16.msra.mxu0 0
    %948 = vmatprep.subr.bf16.mxu0 0
    %949 = vmatpush1.bf16.msra.mxu0 0
    %950 = vmatprep.subr.bf16.mxu0 0
    %951 = vmatpush1.bf16.msra.mxu0 0
    %952 = vmatprep.subr.bf16.mxu0 0
    %953 = vmatpush1.bf16.msra.mxu0 0
    %954 = vmatprep.subr.bf16.mxu0 0
    %955 = vmatpush1.bf16.msra.mxu0 0
    %956 = vmatprep.mubr.bf16.mxu0 0
    %957 = vmatmul.mubr.bf16.gmra.mrb[0].mxu0 %v919
    %v958 = vpop.f32.mrb[0].mxu0
    %v959 = vadd.f32 0.0, %v958
    %v960 = vpop.f32.mrb[0].mxu0
    %v961 = vpop.f32.mrb[0].mxu0
    %v962 = vpop.f32.mrb[0].mxu0
    %963 = vdwg.mxu0
    %v965 = vsel %vm396, %v865, 0
    %v968 = vsel %vm874, %v385, 0
    %970 = vmatprep.subr.bf16.mxu0 0
    %971 = vmatpush1.bf16.msra.mxu0 %v968
    %972 = vmatprep.subr.bf16.mxu0 0
    %973 = vmatpush1.bf16.msra.mxu0 0
    %974 = vmatprep.subr.bf16.mxu0 0
    %975 = vmatpush1.bf16.msra.mxu0 0
    %976 = vmatprep.subr.bf16.mxu0 0
    %977 = vmatpush1.bf16.msra.mxu0 0
    %978 = vmatprep.subr.bf16.mxu0 0
    %979 = vmatpush1.bf16.msra.mxu0 0
    %980 = vmatprep.subr.bf16.mxu0 0
    %981 = vmatpush1.bf16.msra.mxu0 0
    %982 = vmatprep.subr.bf16.mxu0 0
    %983 = vmatpush1.bf16.msra.mxu0 0
    %984 = vmatprep.subr.bf16.mxu0 0
    %985 = vmatpush1.bf16.msra.mxu0 0
    %986 = vmatprep.subr.bf16.mxu0 0
    %987 = vmatpush1.bf16.msra.mxu0 0
    %988 = vmatprep.subr.bf16.mxu0 0
    %989 = vmatpush1.bf16.msra.mxu0 0
    %990 = vmatprep.subr.bf16.mxu0 0
    %991 = vmatpush1.bf16.msra.mxu0 0
    %992 = vmatprep.subr.bf16.mxu0 0
    %993 = vmatpush1.bf16.msra.mxu0 0
    %994 = vmatprep.subr.bf16.mxu0 0
    %995 = vmatpush1.bf16.msra.mxu0 0
    %996 = vmatprep.subr.bf16.mxu0 0
    %997 = vmatpush1.bf16.msra.mxu0 0
    %998 = vmatprep.subr.bf16.mxu0 0
    %999 = vmatpush1.bf16.msra.mxu0 0
    %1000 = vmatprep.subr.bf16.mxu0 0
    %1001 = vmatpush1.bf16.msra.mxu0 0
    %1002 = vmatprep.mubr.bf16.mxu0 0
    %1003 = vmatmul.mubr.bf16.gmra.mrb[0].mxu0 %v965
    %v1004 = vpop.f32.mrb[0].mxu0
    %v1005 = vadd.f32 0.0, %v1004
    %v1006 = vpop.f32.mrb[0].mxu0
    %v1007 = vpop.f32.mrb[0].mxu0
    %v1008 = vpop.f32.mrb[0].mxu0
    %1009 = vdwg.mxu0
    %v1011 = vsel %vm396, %v866, 0
    %v1014 = vsel %vm874, %v386, 0
    %1016 = vmatprep.subr.bf16.mxu0 0
    %1017 = vmatpush1.bf16.msra.mxu0 %v1014
    %1018 = vmatprep.subr.bf16.mxu0 0
    %1019 = vmatpush1.bf16.msra.mxu0 0
    %1020 = vmatprep.subr.bf16.mxu0 0
    %1021 = vmatpush1.bf16.msra.mxu0 0
    %1022 = vmatprep.subr.bf16.mxu0 0
    %1023 = vmatpush1.bf16.msra.mxu0 0
    %1024 = vmatprep.subr.bf16.mxu0 0
    %1025 = vmatpush1.bf16.msra.mxu0 0
    %1026 = vmatprep.subr.bf16.mxu0 0
    %1027 = vmatpush1.bf16.msra.mxu0 0
    %1028 = vmatprep.subr.bf16.mxu0 0
    %1029 = vmatpush1.bf16.msra.mxu0 0
    %1030 = vmatprep.subr.bf16.mxu0 0
    %1031 = vmatpush1.bf16.msra.mxu0 0
    %1032 = vmatprep.subr.bf16.mxu0 0
    %1033 = vmatpush1.bf16.msra.mxu0 0
    %1034 = vmatprep.subr.bf16.mxu0 0
    %1035 = vmatpush1.bf16.msra.mxu0 0
    %1036 = vmatprep.subr.bf16.mxu0 0
    %1037 = vmatpush1.bf16.msra.mxu0 0
    %1038 = vmatprep.subr.bf16.mxu0 0
    %1039 = vmatpush1.bf16.msra.mxu0 0
    %1040 = vmatprep.subr.bf16.mxu0 0
    %1041 = vmatpush1.bf16.msra.mxu0 0
    %1042 = vmatprep.subr.bf16.mxu0 0
    %1043 = vmatpush1.bf16.msra.mxu0 0
    %1044 = vmatprep.subr.bf16.mxu0 0
    %1045 = vmatpush1.bf16.msra.mxu0 0
    %1046 = vmatprep.subr.bf16.mxu0 0
    %1047 = vmatpush1.bf16.msra.mxu0 0
    %1048 = vmatprep.mubr.bf16.mxu0 0
    %1049 = vmatmul.mubr.bf16.gmra.mrb[0].mxu0 %v1011
    %v1050 = vpop.f32.mrb[0].mxu0
    %v1051 = vadd.f32 0.0, %v1050
    %v1052 = vpop.f32.mrb[0].mxu0
    %v1053 = vpop.f32.mrb[0].mxu0
    %v1054 = vpop.f32.mrb[0].mxu0
    %1055 = vdwg.mxu0
    %v1057 = vsel %vm396, %v867, 0
    %v1060 = vsel %vm874, %v387, 0
    %1062 = vmatprep.subr.bf16.mxu0 0
    %1063 = vmatpush1.bf16.msra.mxu0 %v1060
    %1064 = vmatprep.subr.bf16.mxu0 0
    %1065 = vmatpush1.bf16.msra.mxu0 0
    %1066 = vmatprep.subr.bf16.mxu0 0
    %1067 = vmatpush1.bf16.msra.mxu0 0
    %1068 = vmatprep.subr.bf16.mxu0 0
    %1069 = vmatpush1.bf16.msra.mxu0 0
    %1070 = vmatprep.subr.bf16.mxu0 0
    %1071 = vmatpush1.bf16.msra.mxu0 0
    %1072 = vmatprep.subr.bf16.mxu0 0
    %1073 = vmatpush1.bf16.msra.mxu0 0
    %1074 = vmatprep.subr.bf16.mxu0 0
    %1075 = vmatpush1.bf16.msra.mxu0 0
    %1076 = vmatprep.subr.bf16.mxu0 0
    %1077 = vmatpush1.bf16.msra.mxu0 0
    %1078 = vmatprep.subr.bf16.mxu0 0
    %1079 = vmatpush1.bf16.msra.mxu0 0
    %1080 = vmatprep.subr.bf16.mxu0 0
    %1081 = vmatpush1.bf16.msra.mxu0 0
    %1082 = vmatprep.subr.bf16.mxu0 0
    %1083 = vmatpush1.bf16.msra.mxu0 0
    %1084 = vmatprep.subr.bf16.mxu0 0
    %1085 = vmatpush1.bf16.msra.mxu0 0
    %1086 = vmatprep.subr.bf16.mxu0 0
    %1087 = vmatpush1.bf16.msra.mxu0 0
    %1088 = vmatprep.subr.bf16.mxu0 0
    %1089 = vmatpush1.bf16.msra.mxu0 0
    %1090 = vmatprep.subr.bf16.mxu0 0
    %1091 = vmatpush1.bf16.msra.mxu0 0
    %1092 = vmatprep.subr.bf16.mxu0 0
    %1093 = vmatpush1.bf16.msra.mxu0 0
    %1094 = vmatprep.mubr.bf16.mxu0 0
    %1095 = vmatmul.mubr.bf16.gmra.mrb[0].mxu0 %v1057
    %v1096 = vpop.f32.mrb[0].mxu0
    %v1097 = vadd.f32 0.0, %v1096
    %v1098 = vpop.f32.mrb[0].mxu0
    %v1099 = vpop.f32.mrb[0].mxu0
    %v1100 = vpop.f32.mrb[0].mxu0
    %1101 = vdwg.mxu0
    %v1103 = vsel %vm396, %v868, 0
    %v1106 = vsel %vm874, %v388, 0
    %1108 = vmatprep.subr.bf16.mxu0 0
    %1109 = vmatpush1.bf16.msra.mxu0 %v1106
    %1110 = vmatprep.subr.bf16.mxu0 0
    %1111 = vmatpush1.bf16.msra.mxu0 0
    %1112 = vmatprep.subr.bf16.mxu0 0
    %1113 = vmatpush1.bf16.msra.mxu0 0
    %1114 = vmatprep.subr.bf16.mxu0 0
    %1115 = vmatpush1.bf16.msra.mxu0 0
    %1116 = vmatprep.subr.bf16.mxu0 0
    %1117 = vmatpush1.bf16.msra.mxu0 0
    %1118 = vmatprep.subr.bf16.mxu0 0
    %1119 = vmatpush1.bf16.msra.mxu0 0
    %1120 = vmatprep.subr.bf16.mxu0 0
    %1121 = vmatpush1.bf16.msra.mxu0 0
    %1122 = vmatprep.subr.bf16.mxu0 0
    %1123 = vmatpush1.bf16.msra.mxu0 0
    %1124 = vmatprep.subr.bf16.mxu0 0
    %1125 = vmatpush1.bf16.msra.mxu0 0
    %1126 = vmatprep.subr.bf16.mxu0 0
    %1127 = vmatpush1.bf16.msra.mxu0 0
    %1128 = vmatprep.subr.bf16.mxu0 0
    %1129 = vmatpush1.bf16.msra.mxu0 0
    %1130 = vmatprep.subr.bf16.mxu0 0
    %1131 = vmatpush1.bf16.msra.mxu0 0
    %1132 = vmatprep.subr.bf16.mxu0 0
    %1133 = vmatpush1.bf16.msra.mxu0 0
    %1134 = vmatprep.subr.bf16.mxu0 0
    %1135 = vmatpush1.bf16.msra.mxu0 0
    %1136 = vmatprep.subr.bf16.mxu0 0
    %1137 = vmatpush1.bf16.msra.mxu0 0
    %1138 = vmatprep.subr.bf16.mxu0 0
    %1139 = vmatpush1.bf16.msra.mxu0 0
    %1140 = vmatprep.mubr.bf16.mxu0 0
    %1141 = vmatmul.mubr.bf16.gmra.mrb[0].mxu0 %v1103
    %v1142 = vpop.f32.mrb[0].mxu0
    %v1143 = vadd.f32 0.0, %v1142
    %v1144 = vpop.f32.mrb[0].mxu0
    %v1145 = vpop.f32.mrb[0].mxu0
    %v1146 = vpop.f32.mrb[0].mxu0
    %1147 = vdwg.mxu0
    %v1149 = vsel %vm396, %v869, 0
    %v1152 = vsel %vm874, %v389, 0
    %1154 = vmatprep.subr.bf16.mxu0 0
    %1155 = vmatpush1.bf16.msra.mxu0 %v1152
    %1156 = vmatprep.subr.bf16.mxu0 0
    %1157 = vmatpush1.bf16.msra.mxu0 0
    %1158 = vmatprep.subr.bf16.mxu0 0
    %1159 = vmatpush1.bf16.msra.mxu0 0
    %1160 = vmatprep.subr.bf16.mxu0 0
    %1161 = vmatpush1.bf16.msra.mxu0 0
    %1162 = vmatprep.subr.bf16.mxu0 0
    %1163 = vmatpush1.bf16.msra.mxu0 0
    %1164 = vmatprep.subr.bf16.mxu0 0
    %1165 = vmatpush1.bf16.msra.mxu0 0
    %1166 = vmatprep.subr.bf16.mxu0 0
    %1167 = vmatpush1.bf16.msra.mxu0 0
    %1168 = vmatprep.subr.bf16.mxu0 0
    %1169 = vmatpush1.bf16.msra.mxu0 0
    %1170 = vmatprep.subr.bf16.mxu0 0
    %1171 = vmatpush1.bf16.msra.mxu0 0
    %1172 = vmatprep.subr.bf16.mxu0 0
    %1173 = vmatpush1.bf16.msra.mxu0 0
    %1174 = vmatprep.subr.bf16.mxu0 0
    %1175 = vmatpush1.bf16.msra.mxu0 0
    %1176 = vmatprep.subr.bf16.mxu0 0
    %1177 = vmatpush1.bf16.msra.mxu0 0
    %1178 = vmatprep.subr.bf16.mxu0 0
    %1179 = vmatpush1.bf16.msra.mxu0 0
    %1180 = vmatprep.subr.bf16.mxu0 0
    %1181 = vmatpush1.bf16.msra.mxu0 0
    %1182 = vmatprep.subr.bf16.mxu0 0
    %1183 = vmatpush1.bf16.msra.mxu0 0
    %1184 = vmatprep.subr.bf16.mxu0 0
    %1185 = vmatpush1.bf16.msra.mxu0 0
    %1186 = vmatprep.mubr.bf16.mxu0 0
    %1187 = vmatmul.mubr.bf16.gmra.mrb[0].mxu0 %v1149
    %v1188 = vpop.f32.mrb[0].mxu0
    %v1189 = vadd.f32 0.0, %v1188
    %v1190 = vpop.f32.mrb[0].mxu0
    %v1191 = vpop.f32.mrb[0].mxu0
    %v1192 = vpop.f32.mrb[0].mxu0
    %1193 = vdwg.mxu0
    %v1195 = vsel %vm396, %v870, 0
    %v1198 = vsel %vm874, %v390, 0
    %1200 = vmatprep.subr.bf16.mxu0 0
    %1201 = vmatpush1.bf16.msra.mxu0 %v1198
    %1202 = vmatprep.subr.bf16.mxu0 0
    %1203 = vmatpush1.bf16.msra.mxu0 0
    %1204 = vmatprep.subr.bf16.mxu0 0
    %1205 = vmatpush1.bf16.msra.mxu0 0
    %1206 = vmatprep.subr.bf16.mxu0 0
    %1207 = vmatpush1.bf16.msra.mxu0 0
    %1208 = vmatprep.subr.bf16.mxu0 0
    %1209 = vmatpush1.bf16.msra.mxu0 0
    %1210 = vmatprep.subr.bf16.mxu0 0
    %1211 = vmatpush1.bf16.msra.mxu0 0
    %1212 = vmatprep.subr.bf16.mxu0 0
    %1213 = vmatpush1.bf16.msra.mxu0 0
    %1214 = vmatprep.subr.bf16.mxu0 0
    %1215 = vmatpush1.bf16.msra.mxu0 0
    %1216 = vmatprep.subr.bf16.mxu0 0
    %1217 = vmatpush1.bf16.msra.mxu0 0
    %1218 = vmatprep.subr.bf16.mxu0 0
    %1219 = vmatpush1.bf16.msra.mxu0 0
    %1220 = vmatprep.subr.bf16.mxu0 0
    %1221 = vmatpush1.bf16.msra.mxu0 0
    %1222 = vmatprep.subr.bf16.mxu0 0
    %1223 = vmatpush1.bf16.msra.mxu0 0
    %1224 = vmatprep.subr.bf16.mxu0 0
    %1225 = vmatpush1.bf16.msra.mxu0 0
    %1226 = vmatprep.subr.bf16.mxu0 0
    %1227 = vmatpush1.bf16.msra.mxu0 0
    %1228 = vmatprep.subr.bf16.mxu0 0
    %1229 = vmatpush1.bf16.msra.mxu0 0
    %1230 = vmatprep.subr.bf16.mxu0 0
    %1231 = vmatpush1.bf16.msra.mxu0 0
    %1232 = vmatprep.mubr.bf16.mxu0 0
    %1233 = vmatmul.mubr.bf16.gmra.mrb[0].mxu0 %v1195
    %v1234 = vpop.f32.mrb[0].mxu0
    %v1235 = vadd.f32 0.0, %v1234
    %v1236 = vpop.f32.mrb[0].mxu0
    %v1237 = vpop.f32.mrb[0].mxu0
    %v1238 = vpop.f32.mrb[0].mxu0
    %1239 = vdwg.mxu0
    %1241 = vrot.lane.b32.xlu0 %v959, 8
    %v1242 = vpop.permute.xlu0 %1241
    %1245 = vrot.lane.b32.xlu0 %v1005, 16
    %v1246 = vpop.permute.xlu0 %1245
    %1249 = vrot.lane.b32.xlu0 %v1051, 24
    %v1250 = vpop.permute.xlu0 %1249
    %v1252 = vsel %vm396, %v913, %v1242
    %vm1253 = vcmask 130048
    %v1254 = vsel %vm1253, %v1252, %v1246
    %vm1255 = vcmask 195584
    %v1256 = vsel %vm1255, %v1254, %v1250
    %1258 = vrot.lane.b32.xlu0 %v1143, 8
    %v1259 = vpop.permute.xlu0 %1258
    %1262 = vrot.lane.b32.xlu0 %v1189, 16
    %v1263 = vpop.permute.xlu0 %1262
    %1266 = vrot.lane.b32.xlu0 %v1235, 24
    %v1267 = vpop.permute.xlu0 %1266
    %v1269 = vsel %vm396, %v1097, %v1259
    %v1270 = vsel %vm1253, %v1269, %v1263
    %v1271 = vsel %vm1255, %v1270, %v1267
    %v1272 = vpack.c.bf16 %v1271, %v1256
    %v1273 = vld [vmem:[%s6] sm:$0xf]
    %v1274 = vld [vmem:[%s6 + $0x4] sm:$0xf]
    %v1275 = vld [vmem:[%s6 + $0x8] sm:$0xf]
    %v1276 = vld [vmem:[%s6 + $0xc] sm:$0xf]
    %v1277 = vld [vmem:[#allocation2] sm:$0x1]
    %v1279 = vlaneseq
    %v1280 = vshrl.u32 %v1279, 7
    %v1281 = vsub.s32 0, %v1280
    %v1282 = vrot.slane %v1277, %v1281
    %v1288 = vunpack.c.l.b16 %v1273
    %v1289 = vunpack.c.l.b16 %v1274
    %v1290 = vunpack.c.l.b16 %v1275
    %v1291 = vunpack.c.l.b16 %v1276
    %v1292 = vpack.c.b16 %v1289, %v1288
    %v1293 = vpack.c.b16 %v1291, %v1290
    %v1297 = vsel %vm88, %v1272, 0
    %1299 = vmatprep.subr.bf16.mxu0 0
    %1300 = vmatpush1.bf16.msra.mxu0 %v1292
    %1301 = vmatprep.subr.bf16.mxu0 0
    %1302 = vmatpush1.bf16.msra.mxu0 %v1293
    %1303 = vmatprep.subr.bf16.mxu0 0
    %1304 = vmatpush1.bf16.msra.mxu0 0
    %1305 = vmatprep.subr.bf16.mxu0 0
    %1306 = vmatpush1.bf16.msra.mxu0 0
    %1307 = vmatprep.subr.bf16.mxu0 0
    %1308 = vmatpush1.bf16.msra.mxu0 0
    %1309 = vmatprep.subr.bf16.mxu0 0
    %1310 = vmatpush1.bf16.msra.mxu0 0
    %1311 = vmatprep.subr.bf16.mxu0 0
    %1312 = vmatpush1.bf16.msra.mxu0 0
    %1313 = vmatprep.subr.bf16.mxu0 0
    %1314 = vmatpush1.bf16.msra.mxu0 0
    %1315 = vmatprep.subr.bf16.mxu0 0
    %1316 = vmatpush1.bf16.msra.mxu0 0
    %1317 = vmatprep.subr.bf16.mxu0 0
    %1318 = vmatpush1.bf16.msra.mxu0 0
    %1319 = vmatprep.subr.bf16.mxu0 0
    %1320 = vmatpush1.bf16.msra.mxu0 0
    %1321 = vmatprep.subr.bf16.mxu0 0
    %1322 = vmatpush1.bf16.msra.mxu0 0
    %1323 = vmatprep.subr.bf16.mxu0 0
    %1324 = vmatpush1.bf16.msra.mxu0 0
    %1325 = vmatprep.subr.bf16.mxu0 0
    %1326 = vmatpush1.bf16.msra.mxu0 0
    %1327 = vmatprep.subr.bf16.mxu0 0
    %1328 = vmatpush1.bf16.msra.mxu0 0
    %1329 = vmatprep.subr.bf16.mxu0 0
    %1330 = vmatpush1.bf16.msra.mxu0 0
    %1331 = vmatprep.mubr.bf16.mxu0 0
    %1332 = vmatmul.mubr.bf16.gmra.mrb[0].mxu0 %v1297
    %v1333 = vpop.f32.mrb[0].mxu0
    %v1334 = vadd.f32 %v1282, %v1333
    %v1335 = vpop.f32.mrb[0].mxu0
    %v1336 = vpop.f32.mrb[0].mxu0
    %v1337 = vadd.f32 %v1282, %v1336
    %v1338 = vpop.f32.mrb[0].mxu0
    %1339 = vdwg.mxu0
    %v1340 = vadd.f32 %v130, %v1334
    %v1341 = vadd.f32 %v131, %v1337
    %v1342 = vld [vmem:[#allocation5] sm:$0x1]
    %v1343 = vld [vmem:[#allocation7] sm:$0x1]
    %v1344 = vsel %vm88, %v1340, 0.0
    %1345 = vadd.xlane.f32.xlu0 %v1344
    %v1346 = vpop.xlane.xlu0 %1345
    %v1347 = vsel %vm88, %v1341, 0.0
    %1348 = vadd.xlane.f32.xlu0 %v1347
    %v1349 = vpop.xlane.xlu0 %1348
    %v1350 = vmul.f32 %v1346, %v95
    %v1351 = vmul.f32 %v1349, %v95
    %v1352 = vsub.f32 %v1340, %v1350
    %v1353 = vsub.f32 %v1341, %v1351
    %v1354 = vmul.f32 %v1352, %v1352
    %v1355 = vmul.f32 %v1353, %v1353
    %v1356 = vsel %vm88, %v1354, 0.0
    %1357 = vadd.xlane.f32.xlu0 %v1356
    %v1358 = vpop.xlane.xlu0 %1357
    %v1359 = vsel %vm88, %v1355, 0.0
    %1360 = vadd.xlane.f32.xlu0 %v1359
    %v1361 = vpop.xlane.xlu0 %1360
    %v1362 = vmul.f32 %v1358, %v95
    %v1363 = vmul.f32 %v1361, %v95
    %v1364 = vadd.f32 %v1362, 1e-05
    %v1365 = vadd.f32 %v1363, 1e-05
    %v1366 = vrsqrt.pop %v1364
    %v1367 = vrsqrt.pop %v1365
    %v1368 = vmul.f32 %v1352, %v1366
    %v1369 = vmul.f32 %v1353, %v1367
    %v1371 = vlaneseq
    %v1372 = vshrl.u32 %v1371, 7
    %v1373 = vsub.s32 0, %v1372
    %v1374 = vrot.slane %v1342, %v1373
    %v1376 = vmul.f32 %v1368, %v1374
    %v1377 = vmul.f32 %v1369, %v1374
    %v1379 = vlaneseq
    %v1380 = vshrl.u32 %v1379, 7
    %v1381 = vsub.s32 0, %v1380
    %v1382 = vrot.slane %v1343, %v1381
    %v1384 = vadd.f32 %v1376, %v1382
    %v1385 = vadd.f32 %v1377, %v1382
    %v1386 = vpack.c.bf16 %v1385, %v1384
    %v1387 = vld [vmem:[%s10] sm:$0xf]
    %v1388 = vld [vmem:[%s10 + $0x4] sm:$0xf]
    %v1389 = vld [vmem:[%s10 + $0x8] sm:$0xf]
    %v1390 = vld [vmem:[%s10 + $0xc] sm:$0xf]
    %v1391 = vld [vmem:[%s11] sm:$0x1]
    %v1393 = vlaneseq
    %v1394 = vshrl.u32 %v1393, 7
    %v1395 = vsub.s32 0, %v1394
    %v1396 = vrot.slane %v1391, %v1395
    %v1402 = vunpack.c.l.b16 %v1387
    %v1403 = vunpack.c.l.b16 %v1388
    %v1404 = vunpack.c.l.b16 %v1389
    %v1405 = vunpack.c.l.b16 %v1390
    %v1406 = vpack.c.b16 %v1403, %v1402
    %v1407 = vpack.c.b16 %v1405, %v1404
    %v1411 = vsel %vm88, %v1386, 0
    %1413 = vmatprep.subr.bf16.mxu0 0
    %1414 = vmatpush1.bf16.msra.mxu0 %v1406
    %1415 = vmatprep.subr.bf16.mxu0 0
    %1416 = vmatpush1.bf16.msra.mxu0 %v1407
    %1417 = vmatprep.subr.bf16.mxu0 0
    %1418 = vmatpush1.bf16.msra.mxu0 0
    %1419 = vmatprep.subr.bf16.mxu0 0
    %1420 = vmatpush1.bf16.msra.mxu0 0
    %1421 = vmatprep.subr.bf16.mxu0 0
    %1422 = vmatpush1.bf16.msra.mxu0 0
    %1423 = vmatprep.subr.bf16.mxu0 0
    %1424 = vmatpush1.bf16.msra.mxu0 0
    %1425 = vmatprep.subr.bf16.mxu0 0
    %1426 = vmatpush1.bf16.msra.mxu0 0
    %1427 = vmatprep.subr.bf16.mxu0 0
    %1428 = vmatpush1.bf16.msra.mxu0 0
    %1429 = vmatprep.subr.bf16.mxu0 0
    %1430 = vmatpush1.bf16.msra.mxu0 0
    %1431 = vmatprep.subr.bf16.mxu0 0
    %1432 = vmatpush1.bf16.msra.mxu0 0
    %1433 = vmatprep.subr.bf16.mxu0 0
    %1434 = vmatpush1.bf16.msra.mxu0 0
    %1435 = vmatprep.subr.bf16.mxu0 0
    %1436 = vmatpush1.bf16.msra.mxu0 0
    %1437 = vmatprep.subr.bf16.mxu0 0
    %1438 = vmatpush1.bf16.msra.mxu0 0
    %1439 = vmatprep.subr.bf16.mxu0 0
    %1440 = vmatpush1.bf16.msra.mxu0 0
    %1441 = vmatprep.subr.bf16.mxu0 0
    %1442 = vmatpush1.bf16.msra.mxu0 0
    %1443 = vmatprep.subr.bf16.mxu0 0
    %1444 = vmatpush1.bf16.msra.mxu0 0
    %1445 = vmatprep.mubr.bf16.mxu0 0
    %1446 = vmatmul.mubr.bf16.gmra.mrb[0].mxu0 %v1411
    %v1447 = vpop.f32.mrb[0].mxu0
    %v1448 = vadd.f32 %v1396, %v1447
    %v1449 = vpop.f32.mrb[0].mxu0
    %v1450 = vpop.f32.mrb[0].mxu0
    %v1451 = vadd.f32 %v1396, %v1450
    %v1452 = vpop.f32.mrb[0].mxu0
    %1453 = vdwg.mxu0
    %v1454 = vmax.f32 %v1448, 0.0
    %v1455 = vmax.f32 %v1451, 0.0
    %v1456 = vpack.c.bf16 %v1455, %v1454
    %v1457 = vld [vmem:[%s12] sm:$0xf]
    %v1458 = vld [vmem:[%s12 + $0x4] sm:$0xf]
    %v1459 = vld [vmem:[%s12 + $0x8] sm:$0xf]
    %v1460 = vld [vmem:[%s12 + $0xc] sm:$0xf]
    %v1461 = vld [vmem:[%s12 + $0x10] sm:$0xf]
    %v1462 = vld [vmem:[%s12 + $0x14] sm:$0xf]
    %v1463 = vld [vmem:[%s12 + $0x18] sm:$0xf]
    %v1464 = vld [vmem:[%s12 + $0x1c] sm:$0xf]
    %v1465 = vld [vmem:[%s12 + $0x20] sm:$0xf]
    %v1466 = vld [vmem:[%s12 + $0x24] sm:$0xf]
    %v1467 = vld [vmem:[%s12 + $0x28] sm:$0xf]
    %v1468 = vld [vmem:[%s12 + $0x2c] sm:$0xf]
    %v1469 = vld [vmem:[%s12 + $0x30] sm:$0xf]
    %v1470 = vld [vmem:[%s12 + $0x34] sm:$0xf]
    %v1471 = vld [vmem:[%s12 + $0x38] sm:$0xf]
    %v1472 = vld [vmem:[%s12 + $0x3c] sm:$0xf]
    %v1473 = vld [vmem:[%s13] sm:$0x1]
    %v1475 = vlaneseq
    %v1476 = vshrl.u32 %v1475, 7
    %v1477 = vsub.s32 0, %v1476
    %v1478 = vrot.slane %v1473, %v1477
    %v1496 = vunpack.c.l.b16 %v1457
    %v1497 = vunpack.c.l.b16 %v1458
    %v1498 = vunpack.c.l.b16 %v1459
    %v1499 = vunpack.c.l.b16 %v1460
    %v1500 = vunpack.c.l.b16 %v1461
    %v1501 = vunpack.c.l.b16 %v1462
    %v1502 = vunpack.c.l.b16 %v1463
    %v1503 = vunpack.c.l.b16 %v1464
    %v1504 = vunpack.c.l.b16 %v1465
    %v1505 = vunpack.c.l.b16 %v1466
    %v1506 = vunpack.c.l.b16 %v1467
    %v1507 = vunpack.c.l.b16 %v1468
    %v1508 = vunpack.c.l.b16 %v1469
    %v1509 = vunpack.c.l.b16 %v1470
    %v1510 = vunpack.c.l.b16 %v1471
    %v1511 = vunpack.c.l.b16 %v1472
    %v1512 = vpack.c.b16 %v1497, %v1496
    %v1513 = vpack.c.b16 %v1499, %v1498
    %v1514 = vpack.c.b16 %v1501, %v1500
    %v1515 = vpack.c.b16 %v1503, %v1502
    %v1516 = vpack.c.b16 %v1505, %v1504
    %v1517 = vpack.c.b16 %v1507, %v1506
    %v1518 = vpack.c.b16 %v1509, %v1508
    %v1519 = vpack.c.b16 %v1511, %v1510
    %1528 = vmatprep.subr.bf16.mxu0 0
    %1529 = vmatpush1.bf16.msra.mxu0 %v1512
    %1530 = vmatprep.subr.bf16.mxu0 0
    %1531 = vmatpush1.bf16.msra.mxu0 %v1513
    %1532 = vmatprep.subr.bf16.mxu0 0
    %1533 = vmatpush1.bf16.msra.mxu0 %v1514
    %1534 = vmatprep.subr.bf16.mxu0 0
    %1535 = vmatpush1.bf16.msra.mxu0 %v1515
    %1536 = vmatprep.subr.bf16.mxu0 0
    %1537 = vmatpush1.bf16.msra.mxu0 %v1516
    %1538 = vmatprep.subr.bf16.mxu0 0
    %1539 = vmatpush1.bf16.msra.mxu0 %v1517
    %1540 = vmatprep.subr.bf16.mxu0 0
    %1541 = vmatpush1.bf16.msra.mxu0 %v1518
    %1542 = vmatprep.subr.bf16.mxu0 0
    %1543 = vmatpush1.bf16.msra.mxu0 %v1519
    %1544 = vmatprep.subr.bf16.mxu0 0
    %1545 = vmatpush1.bf16.msra.mxu0 0
    %1546 = vmatprep.subr.bf16.mxu0 0
    %1547 = vmatpush1.bf16.msra.mxu0 0
    %1548 = vmatprep.subr.bf16.mxu0 0
    %1549 = vmatpush1.bf16.msra.mxu0 0
    %1550 = vmatprep.subr.bf16.mxu0 0
    %1551 = vmatpush1.bf16.msra.mxu0 0
    %1552 = vmatprep.subr.bf16.mxu0 0
    %1553 = vmatpush1.bf16.msra.mxu0 0
    %1554 = vmatprep.subr.bf16.mxu0 0
    %1555 = vmatpush1.bf16.msra.mxu0 0
    %1556 = vmatprep.subr.bf16.mxu0 0
    %1557 = vmatpush1.bf16.msra.mxu0 0
    %1558 = vmatprep.subr.bf16.mxu0 0
    %1559 = vmatpush1.bf16.msra.mxu0 0
    %1560 = vmatprep.mubr.bf16.mxu0 0
    %1561 = vmatmul.mubr.bf16.gmra.mrb[0].mxu0 %v1456
    %v1562 = vpop.f32.mrb[0].mxu0
    %v1563 = vadd.f32 %v1478, %v1562
    %v1564 = vpop.f32.mrb[0].mxu0
    %v1565 = vpop.f32.mrb[0].mxu0
    %v1566 = vadd.f32 %v1478, %v1565
    %v1567 = vpop.f32.mrb[0].mxu0
    %1568 = vdwg.mxu0
    %v1569 = vadd.f32 %v1384, %v1563
    %v1570 = vadd.f32 %v1385, %v1566
    %1571 = vst.msk [vmem:[#allocation8] sm:$0xff] %vm88, %v1569
    %1572 = vst.msk [vmem:[#allocation8 + $0x8] sm:$0xff] %vm88, %v1570
    // Predicated region
    $region70: #{tpu_custom_call.1} parent=1 // pred_check
      _
    $region71: #{tpu_custom_call.1} parent=1 // pred_check_branch
      %1574 = sbr.rel (0) target = $region73
    $region72: #{tpu_custom_call.1} parent=1 // pred_region
      %s1576 = ssub.s32 256, 256
      %1577 = vsyncadd [#allocation4], %s1576
      %s1578 = sshll.u32 [#allocation8], 4
      %s1579 = int_to_ptr.vmem [resolvable:$true] %s1578
      %1584 = dma.vmem_to_hbm [thread:$0]  %s1579, 256, %s14, [#allocation4], 128, 128, 8
    $region73: #{tpu_custom_call.1} parent=1 // pred_fallthru
      _
    // Predicated region
    $region74: #{tpu_custom_call.1} parent=1 // pred_check
      _
    $region75: #{tpu_custom_call.1} parent=1 // pred_check_branch
      %1586 = sbr.rel (0) target = $region77
    $region76: #{tpu_custom_call.1} parent=1 // pred_region
      %1587 = dma.done [#allocation4], 256
    $region77: #{tpu_custom_call.1} parent=1 // pred_fallthru
      _
    %1588 = vsyncpa [#allocation3], 1
    %1589 = vsyncpa [#allocation6], 1
    %1590 = vsyncpa [#allocation4], 1

</llo_original>
